<compile_context>
chip_gen: v5e
topology: v5e:2x2
jax: 0.10.0
libtpu: 0.0.40
codegen_flags: <defaults>
</compile_context>

<pallas_src>
import functools

import numpy as np
import jax
import jax.numpy as jnp
from jax.experimental import pallas as pl
from jax.experimental.pallas import tpu as pltpu


# ----------------------------------------------------------------------------
# Host-side constants (numpy, exact, folded into the jit as constants)
# ----------------------------------------------------------------------------
def _bilinear_matrix(n_in, n_out):
    """1-D bilinear interpolation matrix, PyTorch align_corners=True."""
    m = np.zeros((n_out, n_in), np.float32)
    if n_in == 1:
        m[:, 0] = 1.0
        return m
    scale = (n_in - 1) / (n_out - 1)
    for i in range(n_out):
        src = i * scale
        i0 = min(int(np.floor(src)), n_in - 2)
        frac = src - i0
        m[i, i0] = 1.0 - frac
        m[i, i0 + 1] = frac
    return m


def _upsample_to_wide_matrix(H, W, Ho, Wo):
    """(H*W, Ho*(Wo+2)) matrix: flat input plane -> bilinear-upsampled plane in
    the "wide" layout (row stride Wo+2, the 2 extra columns per row are 0)."""
    Wp = Wo + 2
    mk = np.kron(_bilinear_matrix(H, Ho), _bilinear_matrix(W, Wo))  # (Ho*Wo, H*W)
    mup = np.zeros((H * W, Ho * Wp), np.float32)
    for oy in range(Ho):
        mup[:, oy * Wp:oy * Wp + Wo] = mk[oy * Wo:(oy + 1) * Wo, :].T
    return mup


def _wide_valid_mask(Ho, Wo):
    """(1, Ho*(Wo+2)) 1.0/0.0 mask of the valid columns of the wide layout."""
    Wp = Wo + 2
    m = np.zeros((1, Ho * Wp), np.float32)
    for oy in range(Ho):
        m[0, oy * Wp:oy * Wp + Wo] = 1.0
    return m


# ----------------------------------------------------------------------------
# Fused Up-forward kernel: one grid step == one sample
# ----------------------------------------------------------------------------
def _up_fused_kernel(x_ref, skip_ref, mup_ref, wmask_ref,
                     w1_ref, g1_ref, b1_ref, w2_ref, g2_ref, b2_ref,
                     t_ref, wl_ref, bl_ref,
                     o_ref, xpad_ref,
                     *, Ho, Wo, Cs, Cx, Cin_p, Cmid, Cmid_p, Cout):
    f32, bf16 = jnp.float32, jnp.bfloat16
    Wp = Wo + 2
    S = Ho * Wp                                  # "wide" spatial layout size
    wmask = wmask_ref[...]                       # (1, S) valid-column mask

    # (0) zero the padded-plane scratch (borders / padded channels must be 0).
    xpad_ref[...] = jnp.zeros_like(xpad_ref)

    # (1) skip channels -> interior rows of the zero-padded plane (row stores).
    skip = skip_ref[...].astype(f32)             # (Cs, Ho*Wo)
    for oy in range(Ho):
        xpad_ref[0:Cs, (oy + 1) * Wp + 1:(oy + 1) * Wp + 1 + Wo] = \
            skip[:, oy * Wo:oy * Wo + Wo]

    # (2) bilinear 2x upsample of x as ONE matmul producing the wide layout
    #     (its pad columns are already zero); a single contiguous store at lane
    #     offset Wp+1 drops it into the padded-plane interior.
    up = jnp.dot(x_ref[...], mup_ref[...], preferred_element_type=f32)  # (Cx, S)
    xpad_ref[Cs:Cs + Cx, Wp + 1:Wp + 1 + S] = up

    # im2col: tap (ky,kx) of the padded plane is a CONTIGUOUS lane slice of the
    # flat scratch; 9 lane-dense slices -> (9*C, S) patch operand, one matmul.
    def conv3x3(w_ref, c):
        patches = jnp.concatenate(
            [xpad_ref[0:c, ky * Wp + kx:ky * Wp + kx + S]
             for ky in range(3) for kx in range(3)], axis=0)            # (9c, S)
        return jnp.dot(w_ref[...], patches.astype(bf16),
                       preferred_element_type=f32)

    def group_norm1(v, gamma, beta, n_real):
        # GroupNorm(num_groups=1) over one sample.  Padded channel rows and the
        # masked pad columns are exactly 0, so whole-tile sums are exact sums
        # over the real data.
        # TODO(synk): two-pass stats for large C*H*W (cancellation in E[x^2]).
        mean = jnp.sum(v) / n_real
        var = jnp.maximum(jnp.sum(v * v) / n_real - mean * mean, 0.0)
        a = gamma * jax.lax.rsqrt(var + 1e-5)                           # (C, 1)
        return v * a + (beta - mean * a)

    # (3) conv1 -> GroupNorm(1) -> exact GELU (all f32 elementwise)
    y = conv3x3(w1_ref, Cin_p) * wmask                                  # (Cmid_p, S)
    y = group_norm1(y, g1_ref[...], b1_ref[...], float(Cmid * Ho * Wo))
    y = 0.5 * y * (1.0 + jax.lax.erf(y * 0.7071067811865476))

    # (4) re-pad for conv2: mask the junk columns, ONE contiguous store at lane
    #     offset Wp+1 reproduces the zero-padded plane of y.
    xpad_ref[0:Cmid_p, Wp + 1:Wp + 1 + S] = y * wmask

    # (5) conv2 -> GroupNorm(1)
    z = conv3x3(w2_ref, Cmid_p) * wmask                                 # (Cout_p, S)
    z = group_norm1(z, g2_ref[...], b2_ref[...], float(Cout * Ho * Wo))

    # (6) + Linear(SiLU(t)) broadcast over the spatial (lane) axis
    tt = t_ref[...]                                                     # (1, Demb)
    st = tt * jax.nn.sigmoid(tt)
    emb = jnp.sum(wl_ref[...] * st, axis=-1, keepdims=True) + bl_ref[...]
    z = z + emb

    # (7) wide -> dense spatial layout: Ho contiguous row stores (NCHW output).
    for oy in range(Ho):
        o_ref[:, oy * Wo:oy * Wo + Wo] = z[0:Cout, oy * Wp:oy * Wp + Wo]


# ----------------------------------------------------------------------------
# Up module: parameters + forward
# ----------------------------------------------------------------------------
def init_up_params(key, in_channels, out_channels, emb_dim=4):
    mid = in_channels // 2
    ks = jax.random.split(key, 8)
    return {
        # Conv2d weights in PyTorch layout (Cout, Cin, 3, 3), bias=False
        "w1": jax.random.normal(ks[0], (mid, in_channels, 3, 3), jnp.float32)
              * (1.0 / np.sqrt(9 * in_channels)),
        "g1": 1.0 + 0.1 * jax.random.normal(ks[1], (mid,), jnp.float32),
        "b1": 0.1 * jax.random.normal(ks[2], (mid,), jnp.float32),
        "w2": jax.random.normal(ks[3], (out_channels, mid, 3, 3), jnp.float32)
              * (1.0 / np.sqrt(9 * mid)),
        "g2": 1.0 + 0.1 * jax.random.normal(ks[4], (out_channels,), jnp.float32),
        "b2": 0.1 * jax.random.normal(ks[5], (out_channels,), jnp.float32),
        # Linear(emb_dim -> out_channels), PyTorch layout (out, in)
        "wl": jax.random.normal(ks[6], (out_channels, emb_dim), jnp.float32)
              * (1.0 / np.sqrt(emb_dim)),
        "bl": 0.1 * jax.random.normal(ks[7], (out_channels,), jnp.float32),
    }


def up_forward(params, x, skip_x, t):
    """x: (N, Cx, H, W), skip_x: (N, Cs, 2H, 2W), t: (N, emb_dim). NCHW in/out."""
    f32, bf16 = jnp.float32, jnp.bfloat16
    N, Cx, H, W = x.shape
    _, Cs, Ho, Wo = skip_x.shape
    assert Ho == 2 * H and Wo == 2 * W
    Cin = Cx + Cs
    Cmid = params["w1"].shape[0]
    Cout = params["w2"].shape[0]
    Demb = params["wl"].shape[1]
    Hp, Wp = Ho + 2, Wo + 2
    hwi, hwo = H * W, Ho * Wo
    S = Ho * Wp                                   # "wide" layout size

    rup8 = lambda c: -(-c // 8) * 8
    Cin_p, Cmid_p, Cout_p = rup8(Cin), rup8(Cmid), rup8(Cout)
    C_scr = max(Cin_p, Cmid_p)

    # --- host-side constants --------------------------------------------------
    mup = _upsample_to_wide_matrix(H, W, Ho, Wo)          # (hwi, S)
    wmask = _wide_valid_mask(Ho, Wo)                      # (1, S)

    # conv weights -> (Co, 9*Ci), tap-major / channel-minor, channels padded to
    # multiples of 8 with zeros (exact), cast to bf16 for the MXU.
    w1t = jnp.transpose(params["w1"], (0, 2, 3, 1))                       # (Cmid,3,3,Cin)
    w1t = jnp.pad(w1t, ((0, Cmid_p - Cmid), (0, 0), (0, 0), (0, Cin_p - Cin)))
    w1m = w1t.reshape(Cmid_p, 9 * Cin_p).astype(bf16)
    w2t = jnp.transpose(params["w2"], (0, 2, 3, 1))                       # (Cout,3,3,Cmid)
    w2t = jnp.pad(w2t, ((0, Cout_p - Cout), (0, 0), (0, 0), (0, Cmid_p - Cmid)))
    w2m = w2t.reshape(Cout_p, 9 * Cmid_p).astype(bf16)
    g1 = jnp.pad(params["g1"].reshape(Cmid, 1), ((0, Cmid_p - Cmid), (0, 0))).astype(f32)
    b1 = jnp.pad(params["b1"].reshape(Cmid, 1), ((0, Cmid_p - Cmid), (0, 0))).astype(f32)
    g2 = jnp.pad(params["g2"].reshape(Cout, 1), ((0, Cout_p - Cout), (0, 0))).astype(f32)
    b2 = jnp.pad(params["b2"].reshape(Cout, 1), ((0, Cout_p - Cout), (0, 0))).astype(f32)
    wl = jnp.pad(params["wl"], ((0, Cout_p - Cout), (0, 0))).astype(f32)
    bl = jnp.pad(params["bl"].reshape(Cout, 1), ((0, Cout_p - Cout), (0, 0))).astype(f32)

    # --- scoped-VMEM budget from the actual resident buffers -------------------
    const_bytes = (hwi * S + Cmid_p * 9 * Cin_p + Cout_p * 9 * Cmid_p) * 2 \
                  + (S + 2 * Cmid_p + 3 * Cout_p + Cout_p * Demb) * 4
    per_step_bytes = (Cx * hwi + Cs * hwo) * 2 + (Demb + Cout * hwo) * 4
    scratch_bytes = C_scr * (Hp * Wp + 2) * 4
    work_bytes = 9 * max(Cin_p, Cmid_p) * S * 6 + 6 * max(Cmid_p, Cout_p) * S * 4
    vmem_limit = int(min(max(4 * (const_bytes + 2 * per_step_bytes
                                  + scratch_bytes + work_bytes),
                             8 << 20), 32 << 20))

    kern = functools.partial(
        _up_fused_kernel, Ho=Ho, Wo=Wo, Cs=Cs, Cx=Cx, Cin_p=Cin_p,
        Cmid=Cmid, Cmid_p=Cmid_p, Cout=Cout)

    out = pl.pallas_call(
        kern,
        out_shape=jax.ShapeDtypeStruct((N, Cout, hwo), f32),
        grid=(N,),
        in_specs=[
            pl.BlockSpec((None, Cx, hwi), lambda n: (n, 0, 0)),      # x (flat spatial)
            pl.BlockSpec((None, Cs, hwo), lambda n: (n, 0, 0)),      # skip (flat spatial)
            pl.BlockSpec((hwi, S), lambda n: (0, 0)),                # upsample->wide matrix
            pl.BlockSpec((1, S), lambda n: (0, 0)),                  # wide valid-col mask
            pl.BlockSpec((Cmid_p, 9 * Cin_p), lambda n: (0, 0)),     # conv1 weight
            pl.BlockSpec((Cmid_p, 1), lambda n: (0, 0)),             # gn1 gamma
            pl.BlockSpec((Cmid_p, 1), lambda n: (0, 0)),             # gn1 beta
            pl.BlockSpec((Cout_p, 9 * Cmid_p), lambda n: (0, 0)),    # conv2 weight
            pl.BlockSpec((Cout_p, 1), lambda n: (0, 0)),             # gn2 gamma
            pl.BlockSpec((Cout_p, 1), lambda n: (0, 0)),             # gn2 beta
            pl.BlockSpec((None, 1, Demb), lambda n: (n, 0, 0)),      # t
            pl.BlockSpec((Cout_p, Demb), lambda n: (0, 0)),          # emb linear weight
            pl.BlockSpec((Cout_p, 1), lambda n: (0, 0)),             # emb linear bias
        ],
        out_specs=pl.BlockSpec((None, Cout, hwo), lambda n: (n, 0, 0)),
        scratch_shapes=[pltpu.VMEM((C_scr, Hp * Wp + 2), f32)],      # padded-plane scratch
        compiler_params=pltpu.CompilerParams(
            dimension_semantics=("parallel",),
            vmem_limit_bytes=vmem_limit),
    )(
        x.reshape(N, Cx, hwi).astype(bf16),
        skip_x.reshape(N, Cs, hwo).astype(bf16),
        jnp.asarray(mup, bf16),
        jnp.asarray(wmask, f32),
        w1m, g1, b1, w2m, g2, b2,
        t.reshape(N, 1, Demb).astype(f32),
        wl, bl,
    )
    return out.reshape(N, Cout, Ho, Wo)     # already NCHW: free reshape, no transpose


if __name__ == "__main__":
    key = jax.random.PRNGKey(0)
    k_x, k_skip, k_t, k_p = jax.random.split(key, 4)

    N = 2
    in_channels = 8          # channels after concat
    out_channels = 4
    emb_dim = 4
    Cx = in_channels // 2    # channels of the low-res feature map
    Cs = in_channels - Cx    # skip-connection channels
    H = W = 8                # low-res spatial; output spatial = 16

    x = jax.random.normal(k_x, (N, Cx, H, W), jnp.float32)
    skip_x = jax.random.normal(k_skip, (N, Cs, 2 * H, 2 * W), jnp.float32)
    t = jax.random.normal(k_t, (N, emb_dim), jnp.float32)
    params = init_up_params(k_p, in_channels, out_channels, emb_dim)

    out = jax.jit(functools.partial(up_forward, params))(x, skip_x, t)
    out = jax.block_until_ready(out)
    assert out.shape == (N, out_channels, 2 * H, 2 * W), out.shape
    assert bool(jnp.all(jnp.isfinite(out)))
    print("KERNEL_OK")
</pallas_src>

<mosaic_0001>
module attributes {stable_mosaic.version = 11 : i64} {
  func.func @_up_fused_kernel(%arg0: i32, %arg1: memref<1x4x64xbf16, #tpu.memory_space<vmem>>, %arg2: memref<1x4x256xbf16, #tpu.memory_space<vmem>>, %arg3: memref<64x288xbf16, #tpu.memory_space<vmem>>, %arg4: memref<1x288xf32, #tpu.memory_space<vmem>>, %arg5: memref<8x72xbf16, #tpu.memory_space<vmem>>, %arg6: memref<8x1xf32, #tpu.memory_space<vmem>>, %arg7: memref<8x1xf32, #tpu.memory_space<vmem>>, %arg8: memref<8x72xbf16, #tpu.memory_space<vmem>>, %arg9: memref<8x1xf32, #tpu.memory_space<vmem>>, %arg10: memref<8x1xf32, #tpu.memory_space<vmem>>, %arg11: memref<1x1x4xf32, #tpu.memory_space<vmem>>, %arg12: memref<8x4xf32, #tpu.memory_space<vmem>>, %arg13: memref<8x1xf32, #tpu.memory_space<vmem>>, %arg14: memref<1x4x256xf32, #tpu.memory_space<vmem>>, %arg15: memref<8x326xf32, #tpu.memory_space<vmem>>) attributes {dimension_semantics = [#tpu.dimension_semantics<parallel>], iteration_bounds = array<i64: 2>, scalar_prefetch = 0 : i64, scratch_operands = 1 : i64, tpu.core_type = #tpu.core_type<tc>, window_params = [{transform_indices = @transform_0, window_bounds = array<i64: 1, 4, 64>}, {transform_indices = @transform_1, window_bounds = array<i64: 1, 4, 256>}, {pipeline_mode = #tpu.pipeline_mode<synchronous>, transform_indices = @transform_2, window_bounds = array<i64: 64, 288>}, {pipeline_mode = #tpu.pipeline_mode<synchronous>, transform_indices = @transform_3, window_bounds = array<i64: 1, 288>}, {pipeline_mode = #tpu.pipeline_mode<synchronous>, transform_indices = @transform_4, window_bounds = array<i64: 8, 72>}, {pipeline_mode = #tpu.pipeline_mode<synchronous>, transform_indices = @transform_5, window_bounds = array<i64: 8, 1>}, {pipeline_mode = #tpu.pipeline_mode<synchronous>, transform_indices = @transform_6, window_bounds = array<i64: 8, 1>}, {pipeline_mode = #tpu.pipeline_mode<synchronous>, transform_indices = @transform_7, window_bounds = array<i64: 8, 72>}, {pipeline_mode = #tpu.pipeline_mode<synchronous>, transform_indices = @transform_8, window_bounds = array<i64: 8, 1>}, {pipeline_mode = #tpu.pipeline_mode<synchronous>, transform_indices = @transform_9, window_bounds = array<i64: 8, 1>}, {transform_indices = @transform_10, window_bounds = array<i64: 1, 1, 4>}, {pipeline_mode = #tpu.pipeline_mode<synchronous>, transform_indices = @transform_11, window_bounds = array<i64: 8, 4>}, {pipeline_mode = #tpu.pipeline_mode<synchronous>, transform_indices = @transform_12, window_bounds = array<i64: 8, 1>}, {transform_indices = @transform_13, window_bounds = array<i64: 1, 4, 256>}]} {
    %c0 = arith.constant 0 : index
    %c0_0 = arith.constant 0 : index
    %0 = vector.load %arg4[%c0, %c0_0] : memref<1x288xf32, #tpu.memory_space<vmem>>, vector<1x288xf32>
    %cst = arith.constant 0.000000e+00 : f32
    %1 = vector.broadcast %cst : f32 to vector<8x326xf32>
    %c0_1 = arith.constant 0 : index
    %c0_2 = arith.constant 0 : index
    %2 = vector.load %arg15[%c0_1, %c0_2] : memref<8x326xf32, #tpu.memory_space<vmem>>, vector<8x326xf32>
    tpu.vector_store %arg15[%c0_1, %c0_2], %1 {strides = array<i32>} : memref<8x326xf32, #tpu.memory_space<vmem>>, vector<8x326xf32>,
    %c0_3 = arith.constant 0 : index
    %c0_4 = arith.constant 0 : index
    %c0_5 = arith.constant 0 : index
    %3 = vector.load %arg2[%c0_3, %c0_4, %c0_5] : memref<1x4x256xbf16, #tpu.memory_space<vmem>>, vector<1x4x256xbf16>
    %4 = vector.shape_cast %3 : vector<1x4x256xbf16> to vector<4x256xbf16>
    %5 = arith.extf %4 : vector<4x256xbf16> to vector<4x256xf32>
    %6 = vector.extract_strided_slice %5 {offsets = [0, 0], sizes = [4, 16], strides = [1, 1]} : vector<4x256xf32> to vector<4x16xf32>
    %c0_6 = arith.constant 0 : index
    %c19 = arith.constant 19 : index
    %7 = vector.load %arg15[%c0_6, %c19] : memref<8x326xf32, #tpu.memory_space<vmem>>, vector<4x16xf32>
    tpu.vector_store %arg15[%c0_6, %c19], %6 {strides = array<i32>} : memref<8x326xf32, #tpu.memory_space<vmem>>, vector<4x16xf32>,
    %8 = vector.extract_strided_slice %5 {offsets = [0, 16], sizes = [4, 16], strides = [1, 1]} : vector<4x256xf32> to vector<4x16xf32>
    %c0_7 = arith.constant 0 : index
    %c37 = arith.constant 37 : index
    %9 = vector.load %arg15[%c0_7, %c37] : memref<8x326xf32, #tpu.memory_space<vmem>>, vector<4x16xf32>
    tpu.vector_store %arg15[%c0_7, %c37], %8 {strides = array<i32>} : memref<8x326xf32, #tpu.memory_space<vmem>>, vector<4x16xf32>,
    %10 = vector.extract_strided_slice %5 {offsets = [0, 32], sizes = [4, 16], strides = [1, 1]} : vector<4x256xf32> to vector<4x16xf32>
    %c0_8 = arith.constant 0 : index
    %c55 = arith.constant 55 : index
    %11 = vector.load %arg15[%c0_8, %c55] : memref<8x326xf32, #tpu.memory_space<vmem>>, vector<4x16xf32>
    tpu.vector_store %arg15[%c0_8, %c55], %10 {strides = array<i32>} : memref<8x326xf32, #tpu.memory_space<vmem>>, vector<4x16xf32>,
    %12 = vector.extract_strided_slice %5 {offsets = [0, 48], sizes = [4, 16], strides = [1, 1]} : vector<4x256xf32> to vector<4x16xf32>
    %c0_9 = arith.constant 0 : index
    %c73 = arith.constant 73 : index
    %13 = vector.load %arg15[%c0_9, %c73] : memref<8x326xf32, #tpu.memory_space<vmem>>, vector<4x16xf32>
    tpu.vector_store %arg15[%c0_9, %c73], %12 {strides = array<i32>} : memref<8x326xf32, #tpu.memory_space<vmem>>, vector<4x16xf32>,
    %14 = vector.extract_strided_slice %5 {offsets = [0, 64], sizes = [4, 16], strides = [1, 1]} : vector<4x256xf32> to vector<4x16xf32>
    %c0_10 = arith.constant 0 : index
    %c91 = arith.constant 91 : index
    %15 = vector.load %arg15[%c0_10, %c91] : memref<8x326xf32, #tpu.memory_space<vmem>>, vector<4x16xf32>
    tpu.vector_store %arg15[%c0_10, %c91], %14 {strides = array<i32>} : memref<8x326xf32, #tpu.memory_space<vmem>>, vector<4x16xf32>,
    %16 = vector.extract_strided_slice %5 {offsets = [0, 80], sizes = [4, 16], strides = [1, 1]} : vector<4x256xf32> to vector<4x16xf32>
    %c0_11 = arith.constant 0 : index
    %c109 = arith.constant 109 : index
    %17 = vector.load %arg15[%c0_11, %c109] : memref<8x326xf32, #tpu.memory_space<vmem>>, vector<4x16xf32>
    tpu.vector_store %arg15[%c0_11, %c109], %16 {strides = array<i32>} : memref<8x326xf32, #tpu.memory_space<vmem>>, vector<4x16xf32>,
    %18 = vector.extract_strided_slice %5 {offsets = [0, 96], sizes = [4, 16], strides = [1, 1]} : vector<4x256xf32> to vector<4x16xf32>
    %c0_12 = arith.constant 0 : index
    %c127 = arith.constant 127 : index
    %19 = vector.load %arg15[%c0_12, %c127] : memref<8x326xf32, #tpu.memory_space<vmem>>, vector<4x16xf32>
    tpu.vector_store %arg15[%c0_12, %c127], %18 {strides = array<i32>} : memref<8x326xf32, #tpu.memory_space<vmem>>, vector<4x16xf32>,
    %20 = vector.extract_strided_slice %5 {offsets = [0, 112], sizes = [4, 16], strides = [1, 1]} : vector<4x256xf32> to vector<4x16xf32>
    %c0_13 = arith.constant 0 : index
    %c145 = arith.constant 145 : index
    %21 = vector.load %arg15[%c0_13, %c145] : memref<8x326xf32, #tpu.memory_space<vmem>>, vector<4x16xf32>
    tpu.vector_store %arg15[%c0_13, %c145], %20 {strides = array<i32>} : memref<8x326xf32, #tpu.memory_space<vmem>>, vector<4x16xf32>,
    %22 = vector.extract_strided_slice %5 {offsets = [0, 128], sizes = [4, 16], strides = [1, 1]} : vector<4x256xf32> to vector<4x16xf32>
    %c0_14 = arith.constant 0 : index
    %c163 = arith.constant 163 : index
    %23 = vector.load %arg15[%c0_14, %c163] : memref<8x326xf32, #tpu.memory_space<vmem>>, vector<4x16xf32>
    tpu.vector_store %arg15[%c0_14, %c163], %22 {strides = array<i32>} : memref<8x326xf32, #tpu.memory_space<vmem>>, vector<4x16xf32>,
    %24 = vector.extract_strided_slice %5 {offsets = [0, 144], sizes = [4, 16], strides = [1, 1]} : vector<4x256xf32> to vector<4x16xf32>
    %c0_15 = arith.constant 0 : index
    %c181 = arith.constant 181 : index
    %25 = vector.load %arg15[%c0_15, %c181] : memref<8x326xf32, #tpu.memory_space<vmem>>, vector<4x16xf32>
    tpu.vector_store %arg15[%c0_15, %c181], %24 {strides = array<i32>} : memref<8x326xf32, #tpu.memory_space<vmem>>, vector<4x16xf32>,
    %26 = vector.extract_strided_slice %5 {offsets = [0, 160], sizes = [4, 16], strides = [1, 1]} : vector<4x256xf32> to vector<4x16xf32>
    %c0_16 = arith.constant 0 : index
    %c199 = arith.constant 199 : index
    %27 = vector.load %arg15[%c0_16, %c199] : memref<8x326xf32, #tpu.memory_space<vmem>>, vector<4x16xf32>
    tpu.vector_store %arg15[%c0_16, %c199], %26 {strides = array<i32>} : memref<8x326xf32, #tpu.memory_space<vmem>>, vector<4x16xf32>,
    %28 = vector.extract_strided_slice %5 {offsets = [0, 176], sizes = [4, 16], strides = [1, 1]} : vector<4x256xf32> to vector<4x16xf32>
    %c0_17 = arith.constant 0 : index
    %c217 = arith.constant 217 : index
    %29 = vector.load %arg15[%c0_17, %c217] : memref<8x326xf32, #tpu.memory_space<vmem>>, vector<4x16xf32>
    tpu.vector_store %arg15[%c0_17, %c217], %28 {strides = array<i32>} : memref<8x326xf32, #tpu.memory_space<vmem>>, vector<4x16xf32>,
    %30 = vector.extract_strided_slice %5 {offsets = [0, 192], sizes = [4, 16], strides = [1, 1]} : vector<4x256xf32> to vector<4x16xf32>
    %c0_18 = arith.constant 0 : index
    %c235 = arith.constant 235 : index
    %31 = vector.load %arg15[%c0_18, %c235] : memref<8x326xf32, #tpu.memory_space<vmem>>, vector<4x16xf32>
    tpu.vector_store %arg15[%c0_18, %c235], %30 {strides = array<i32>} : memref<8x326xf32, #tpu.memory_space<vmem>>, vector<4x16xf32>,
    %32 = vector.extract_strided_slice %5 {offsets = [0, 208], sizes = [4, 16], strides = [1, 1]} : vector<4x256xf32> to vector<4x16xf32>
    %c0_19 = arith.constant 0 : index
    %c253 = arith.constant 253 : index
    %33 = vector.load %arg15[%c0_19, %c253] : memref<8x326xf32, #tpu.memory_space<vmem>>, vector<4x16xf32>
    tpu.vector_store %arg15[%c0_19, %c253], %32 {strides = array<i32>} : memref<8x326xf32, #tpu.memory_space<vmem>>, vector<4x16xf32>,
    %34 = vector.extract_strided_slice %5 {offsets = [0, 224], sizes = [4, 16], strides = [1, 1]} : vector<4x256xf32> to vector<4x16xf32>
    %c0_20 = arith.constant 0 : index
    %c271 = arith.constant 271 : index
    %35 = vector.load %arg15[%c0_20, %c271] : memref<8x326xf32, #tpu.memory_space<vmem>>, vector<4x16xf32>
    tpu.vector_store %arg15[%c0_20, %c271], %34 {strides = array<i32>} : memref<8x326xf32, #tpu.memory_space<vmem>>, vector<4x16xf32>,
    %36 = vector.extract_strided_slice %5 {offsets = [0, 240], sizes = [4, 16], strides = [1, 1]} : vector<4x256xf32> to vector<4x16xf32>
    %c0_21 = arith.constant 0 : index
    %c289 = arith.constant 289 : index
    %37 = vector.load %arg15[%c0_21, %c289] : memref<8x326xf32, #tpu.memory_space<vmem>>, vector<4x16xf32>
    tpu.vector_store %arg15[%c0_21, %c289], %36 {strides = array<i32>} : memref<8x326xf32, #tpu.memory_space<vmem>>, vector<4x16xf32>,
    %c0_22 = arith.constant 0 : index
    %c0_23 = arith.constant 0 : index
    %c0_24 = arith.constant 0 : index
    %38 = vector.load %arg1[%c0_22, %c0_23, %c0_24] : memref<1x4x64xbf16, #tpu.memory_space<vmem>>, vector<1x4x64xbf16>
    %39 = vector.shape_cast %38 : vector<1x4x64xbf16> to vector<4x64xbf16>
    %c0_25 = arith.constant 0 : index
    %c0_26 = arith.constant 0 : index
    %40 = vector.load %arg3[%c0_25, %c0_26] : memref<64x288xbf16, #tpu.memory_space<vmem>>, vector<64x288xbf16>
    %cst_27 = arith.constant dense<0.000000e+00> : vector<4x288xf32>
    %41 = tpu.matmul %39, %40, %cst_27 {dimension_numbers = #tpu.dot_dimension_numbers<[1], [0], [0], [1], [0, 0, 1, 1], [], []>} : vector<4x64xbf16>, vector<64x288xbf16>, vector<4x288xf32> -> vector<4x288xf32>
    %c4 = arith.constant 4 : index
    %c19_28 = arith.constant 19 : index
    %42 = vector.load %arg15[%c4, %c19_28] : memref<8x326xf32, #tpu.memory_space<vmem>>, vector<4x288xf32>
    tpu.vector_store %arg15[%c4, %c19_28], %41 {strides = array<i32>} : memref<8x326xf32, #tpu.memory_space<vmem>>, vector<4x288xf32>,
    %c0_29 = arith.constant 0 : index
    %c0_30 = arith.constant 0 : index
    %43 = vector.load %arg15[%c0_29, %c0_30] : memref<8x326xf32, #tpu.memory_space<vmem>>, vector<8x288xf32>
    %c0_31 = arith.constant 0 : index
    %c1 = arith.constant 1 : index
    %44 = vector.load %arg15[%c0_31, %c1] : memref<8x326xf32, #tpu.memory_space<vmem>>, vector<8x288xf32>
    %c0_32 = arith.constant 0 : index
    %c2 = arith.constant 2 : index
    %45 = vector.load %arg15[%c0_32, %c2] : memref<8x326xf32, #tpu.memory_space<vmem>>, vector<8x288xf32>
    %c0_33 = arith.constant 0 : index
    %c18 = arith.constant 18 : index
    %46 = vector.load %arg15[%c0_33, %c18] : memref<8x326xf32, #tpu.memory_space<vmem>>, vector<8x288xf32>
    %c0_34 = arith.constant 0 : index
    %c19_35 = arith.constant 19 : index
    %47 = vector.load %arg15[%c0_34, %c19_35] : memref<8x326xf32, #tpu.memory_space<vmem>>, vector<8x288xf32>
    %c0_36 = arith.constant 0 : index
    %c20 = arith.constant 20 : index
    %48 = vector.load %arg15[%c0_36, %c20] : memref<8x326xf32, #tpu.memory_space<vmem>>, vector<8x288xf32>
    %c0_37 = arith.constant 0 : index
    %c36 = arith.constant 36 : index
    %49 = vector.load %arg15[%c0_37, %c36] : memref<8x326xf32, #tpu.memory_space<vmem>>, vector<8x288xf32>
    %c0_38 = arith.constant 0 : index
    %c37_39 = arith.constant 37 : index
    %50 = vector.load %arg15[%c0_38, %c37_39] : memref<8x326xf32, #tpu.memory_space<vmem>>, vector<8x288xf32>
    %c0_40 = arith.constant 0 : index
    %c38 = arith.constant 38 : index
    %51 = vector.load %arg15[%c0_40, %c38] : memref<8x326xf32, #tpu.memory_space<vmem>>, vector<8x288xf32>
    %52 = tpu.concatenate %43, %44, %45, %46, %47, %48, %49, %50, %51 in 0 : vector<8x288xf32>, vector<8x288xf32>, vector<8x288xf32>, vector<8x288xf32>, vector<8x288xf32>, vector<8x288xf32>, vector<8x288xf32>, vector<8x288xf32>, vector<8x288xf32> -> vector<72x288xf32>
    %c0_41 = arith.constant 0 : index
    %c0_42 = arith.constant 0 : index
    %53 = vector.load %arg5[%c0_41, %c0_42] : memref<8x72xbf16, #tpu.memory_space<vmem>>, vector<8x72xbf16>
    %54 = arith.truncf %52 : vector<72x288xf32> to vector<72x288xbf16>
    %cst_43 = arith.constant dense<0.000000e+00> : vector<8x288xf32>
    %55 = tpu.matmul %53, %54, %cst_43 {dimension_numbers = #tpu.dot_dimension_numbers<[1], [0], [0], [1], [0, 0, 1, 1], [], []>} : vector<8x72xbf16>, vector<72x288xbf16>, vector<8x288xf32> -> vector<8x288xf32>
    %56 = vector.broadcast %0 : vector<1x288xf32> to vector<8x288xf32>
    %57 = arith.mulf %55, %56 : vector<8x288xf32>
    %c0_44 = arith.constant 0 : index
    %c0_45 = arith.constant 0 : index
    %58 = vector.load %arg6[%c0_44, %c0_45] : memref<8x1xf32, #tpu.memory_space<vmem>>, vector<8x1xf32>
    %c0_46 = arith.constant 0 : index
    %c0_47 = arith.constant 0 : index
    %59 = vector.load %arg7[%c0_46, %c0_47] : memref<8x1xf32, #tpu.memory_space<vmem>>, vector<8x1xf32>
    %60 = vector.shape_cast %57 : vector<8x288xf32> to vector<1x8x288xf32>
    %cst_48 = arith.constant dense<0.000000e+00> : vector<1xf32>
    %61 = vector.multi_reduction <add>, %60, %cst_48 [1, 2] : vector<1x8x288xf32> to vector<1xf32>
    %62 = vector.shape_cast %61 : vector<1xf32> to vector<1x1x1xf32>
    %63 = vector.extract %62[0, 0, 0] : f32 from vector<1x1x1xf32>
    %cst_49 = arith.constant 1.024000e+03 : f32
    %64 = arith.divf %63, %cst_49 : f32
    %65 = arith.mulf %57, %57 : vector<8x288xf32>
    %66 = vector.shape_cast %65 : vector<8x288xf32> to vector<1x8x288xf32>
    %cst_50 = arith.constant dense<0.000000e+00> : vector<1xf32>
    %67 = vector.multi_reduction <add>, %66, %cst_50 [1, 2] : vector<1x8x288xf32> to vector<1xf32>
    %68 = vector.shape_cast %67 : vector<1xf32> to vector<1x1x1xf32>
    %69 = vector.extract %68[0, 0, 0] : f32 from vector<1x1x1xf32>
    %cst_51 = arith.constant 1.024000e+03 : f32
    %70 = arith.divf %69, %cst_51 : f32
    %71 = arith.mulf %64, %64 : f32
    %72 = arith.subf %70, %71 : f32
    %cst_52 = arith.constant 0.000000e+00 : f32
    %73 = arith.maximumf %72, %cst_52 : f32
    %cst_53 = arith.constant 9.99999974E-6 : f32
    %74 = arith.addf %73, %cst_53 : f32
    %75 = math.rsqrt %74 : f32
    %76 = vector.broadcast %75 : f32 to vector<8x1xf32>
    %77 = arith.mulf %58, %76 : vector<8x1xf32>
    %78 = vector.broadcast %77 : vector<8x1xf32> to vector<8x288xf32>
    %79 = arith.mulf %57, %78 : vector<8x288xf32>
    %80 = vector.broadcast %64 : f32 to vector<8x1xf32>
    %81 = arith.mulf %80, %77 : vector<8x1xf32>
    %82 = arith.subf %59, %81 : vector<8x1xf32>
    %83 = vector.broadcast %82 : vector<8x1xf32> to vector<8x288xf32>
    %84 = arith.addf %79, %83 : vector<8x288xf32>
    %cst_54 = arith.constant 5.000000e-01 : f32
    %85 = vector.broadcast %cst_54 : f32 to vector<8x288xf32>
    %86 = arith.mulf %85, %84 : vector<8x288xf32>
    %cst_55 = arith.constant 0.707106769 : f32
    %87 = vector.broadcast %cst_55 : f32 to vector<8x288xf32>
    %88 = arith.mulf %84, %87 : vector<8x288xf32>
    %89 = math.erf %88 : vector<8x288xf32>
    %cst_56 = arith.constant 1.000000e+00 : f32
    %90 = vector.broadcast %cst_56 : f32 to vector<8x288xf32>
    %91 = arith.addf %90, %89 : vector<8x288xf32>
    %92 = arith.mulf %86, %91 : vector<8x288xf32>
    %93 = vector.broadcast %0 : vector<1x288xf32> to vector<8x288xf32>
    %94 = arith.mulf %92, %93 : vector<8x288xf32>
    %c0_57 = arith.constant 0 : index
    %c19_58 = arith.constant 19 : index
    %95 = vector.load %arg15[%c0_57, %c19_58] : memref<8x326xf32, #tpu.memory_space<vmem>>, vector<8x288xf32>
    tpu.vector_store %arg15[%c0_57, %c19_58], %94 {strides = array<i32>} : memref<8x326xf32, #tpu.memory_space<vmem>>, vector<8x288xf32>,
    %c0_59 = arith.constant 0 : index
    %c0_60 = arith.constant 0 : index
    %96 = vector.load %arg15[%c0_59, %c0_60] : memref<8x326xf32, #tpu.memory_space<vmem>>, vector<8x288xf32>
    %c0_61 = arith.constant 0 : index
    %c1_62 = arith.constant 1 : index
    %97 = vector.load %arg15[%c0_61, %c1_62] : memref<8x326xf32, #tpu.memory_space<vmem>>, vector<8x288xf32>
    %c0_63 = arith.constant 0 : index
    %c2_64 = arith.constant 2 : index
    %98 = vector.load %arg15[%c0_63, %c2_64] : memref<8x326xf32, #tpu.memory_space<vmem>>, vector<8x288xf32>
    %c0_65 = arith.constant 0 : index
    %c18_66 = arith.constant 18 : index
    %99 = vector.load %arg15[%c0_65, %c18_66] : memref<8x326xf32, #tpu.memory_space<vmem>>, vector<8x288xf32>
    %c0_67 = arith.constant 0 : index
    %c19_68 = arith.constant 19 : index
    %100 = vector.load %arg15[%c0_67, %c19_68] : memref<8x326xf32, #tpu.memory_space<vmem>>, vector<8x288xf32>
    %c0_69 = arith.constant 0 : index
    %c20_70 = arith.constant 20 : index
    %101 = vector.load %arg15[%c0_69, %c20_70] : memref<8x326xf32, #tpu.memory_space<vmem>>, vector<8x288xf32>
    %c0_71 = arith.constant 0 : index
    %c36_72 = arith.constant 36 : index
    %102 = vector.load %arg15[%c0_71, %c36_72] : memref<8x326xf32, #tpu.memory_space<vmem>>, vector<8x288xf32>
    %c0_73 = arith.constant 0 : index
    %c37_74 = arith.constant 37 : index
    %103 = vector.load %arg15[%c0_73, %c37_74] : memref<8x326xf32, #tpu.memory_space<vmem>>, vector<8x288xf32>
    %c0_75 = arith.constant 0 : index
    %c38_76 = arith.constant 38 : index
    %104 = vector.load %arg15[%c0_75, %c38_76] : memref<8x326xf32, #tpu.memory_space<vmem>>, vector<8x288xf32>
    %105 = tpu.concatenate %96, %97, %98, %99, %100, %101, %102, %103, %104 in 0 : vector<8x288xf32>, vector<8x288xf32>, vector<8x288xf32>, vector<8x288xf32>, vector<8x288xf32>, vector<8x288xf32>, vector<8x288xf32>, vector<8x288xf32>, vector<8x288xf32> -> vector<72x288xf32>
    %c0_77 = arith.constant 0 : index
    %c0_78 = arith.constant 0 : index
    %106 = vector.load %arg8[%c0_77, %c0_78] : memref<8x72xbf16, #tpu.memory_space<vmem>>, vector<8x72xbf16>
    %107 = arith.truncf %105 : vector<72x288xf32> to vector<72x288xbf16>
    %cst_79 = arith.constant dense<0.000000e+00> : vector<8x288xf32>
    %108 = tpu.matmul %106, %107, %cst_79 {dimension_numbers = #tpu.dot_dimension_numbers<[1], [0], [0], [1], [0, 0, 1, 1], [], []>} : vector<8x72xbf16>, vector<72x288xbf16>, vector<8x288xf32> -> vector<8x288xf32>
    %109 = vector.broadcast %0 : vector<1x288xf32> to vector<8x288xf32>
    %110 = arith.mulf %108, %109 : vector<8x288xf32>
    %c0_80 = arith.constant 0 : index
    %c0_81 = arith.constant 0 : index
    %111 = vector.load %arg9[%c0_80, %c0_81] : memref<8x1xf32, #tpu.memory_space<vmem>>, vector<8x1xf32>
    %c0_82 = arith.constant 0 : index
    %c0_83 = arith.constant 0 : index
    %112 = vector.load %arg10[%c0_82, %c0_83] : memref<8x1xf32, #tpu.memory_space<vmem>>, vector<8x1xf32>
    %113 = vector.shape_cast %110 : vector<8x288xf32> to vector<1x8x288xf32>
    %cst_84 = arith.constant dense<0.000000e+00> : vector<1xf32>
    %114 = vector.multi_reduction <add>, %113, %cst_84 [1, 2] : vector<1x8x288xf32> to vector<1xf32>
    %115 = vector.shape_cast %114 : vector<1xf32> to vector<1x1x1xf32>
    %116 = vector.extract %115[0, 0, 0] : f32 from vector<1x1x1xf32>
    %cst_85 = arith.constant 1.024000e+03 : f32
    %117 = arith.divf %116, %cst_85 : f32
    %118 = arith.mulf %110, %110 : vector<8x288xf32>
    %119 = vector.shape_cast %118 : vector<8x288xf32> to vector<1x8x288xf32>
    %cst_86 = arith.constant dense<0.000000e+00> : vector<1xf32>
    %120 = vector.multi_reduction <add>, %119, %cst_86 [1, 2] : vector<1x8x288xf32> to vector<1xf32>
    %121 = vector.shape_cast %120 : vector<1xf32> to vector<1x1x1xf32>
    %122 = vector.extract %121[0, 0, 0] : f32 from vector<1x1x1xf32>
    %cst_87 = arith.constant 1.024000e+03 : f32
    %123 = arith.divf %122, %cst_87 : f32
    %124 = arith.mulf %117, %117 : f32
    %125 = arith.subf %123, %124 : f32
    %cst_88 = arith.constant 0.000000e+00 : f32
    %126 = arith.maximumf %125, %cst_88 : f32
    %cst_89 = arith.constant 9.99999974E-6 : f32
    %127 = arith.addf %126, %cst_89 : f32
    %128 = math.rsqrt %127 : f32
    %129 = vector.broadcast %128 : f32 to vector<8x1xf32>
    %130 = arith.mulf %111, %129 : vector<8x1xf32>
    %131 = vector.broadcast %130 : vector<8x1xf32> to vector<8x288xf32>
    %132 = arith.mulf %110, %131 : vector<8x288xf32>
    %133 = vector.broadcast %117 : f32 to vector<8x1xf32>
    %134 = arith.mulf %133, %130 : vector<8x1xf32>
    %135 = arith.subf %112, %134 : vector<8x1xf32>
    %136 = vector.broadcast %135 : vector<8x1xf32> to vector<8x288xf32>
    %137 = arith.addf %132, %136 : vector<8x288xf32>
    %c0_90 = arith.constant 0 : index
    %c0_91 = arith.constant 0 : index
    %c0_92 = arith.constant 0 : index
    %138 = vector.load %arg11[%c0_90, %c0_91, %c0_92] : memref<1x1x4xf32, #tpu.memory_space<vmem>>, vector<1x1x4xf32>
    %139 = vector.shape_cast %138 : vector<1x1x4xf32> to vector<1x4xf32>
    %140 = arith.negf %139 : vector<1x4xf32>
    %141 = math.exp %140 : vector<1x4xf32>
    %cst_93 = arith.constant 1.000000e+00 : f32
    %142 = vector.broadcast %cst_93 : f32 to vector<1x4xf32>
    %143 = arith.addf %142, %141 : vector<1x4xf32>
    %144 = arith.divf %142, %143 : vector<1x4xf32>
    %145 = arith.mulf %139, %144 : vector<1x4xf32>
    %c0_94 = arith.constant 0 : index
    %c0_95 = arith.constant 0 : index
    %146 = vector.load %arg12[%c0_94, %c0_95] : memref<8x4xf32, #tpu.memory_space<vmem>>, vector<8x4xf32>
    %147 = vector.broadcast %145 : vector<1x4xf32> to vector<8x4xf32>
    %148 = arith.mulf %146, %147 : vector<8x4xf32>
    %cst_96 = arith.constant dense<0.000000e+00> : vector<8xf32>
    %149 = vector.multi_reduction <add>, %148, %cst_96 [1] : vector<8x4xf32> to vector<8xf32>
    %150 = vector.shape_cast %149 : vector<8xf32> to vector<8x1xf32>
    %c0_97 = arith.constant 0 : index
    %c0_98 = arith.constant 0 : index
    %151 = vector.load %arg13[%c0_97, %c0_98] : memref<8x1xf32, #tpu.memory_space<vmem>>, vector<8x1xf32>
    %152 = arith.addf %150, %151 : vector<8x1xf32>
    %153 = vector.broadcast %152 : vector<8x1xf32> to vector<8x288xf32>
    %154 = arith.addf %137, %153 : vector<8x288xf32>
    %155 = vector.extract_strided_slice %154 {offsets = [0, 0], sizes = [4, 16], strides = [1, 1]} : vector<8x288xf32> to vector<4x16xf32>
    %c0_99 = arith.constant 0 : index
    %c0_100 = arith.constant 0 : index
    %c0_101 = arith.constant 0 : index
    %156 = vector.load %arg14[%c0_99, %c0_100, %c0_101] : memref<1x4x256xf32, #tpu.memory_space<vmem>>, vector<1x4x16xf32>
    %157 = vector.shape_cast %156 : vector<1x4x16xf32> to vector<4x16xf32>
    %158 = vector.shape_cast %155 : vector<4x16xf32> to vector<1x4x16xf32>
    tpu.vector_store %arg14[%c0_99, %c0_100, %c0_101], %158 {strides = array<i32>} : memref<1x4x256xf32, #tpu.memory_space<vmem>>, vector<1x4x16xf32>,
    %159 = vector.extract_strided_slice %154 {offsets = [0, 18], sizes = [4, 16], strides = [1, 1]} : vector<8x288xf32> to vector<4x16xf32>
    %c0_102 = arith.constant 0 : index
    %c0_103 = arith.constant 0 : index
    %c16 = arith.constant 16 : index
    %160 = vector.load %arg14[%c0_102, %c0_103, %c16] : memref<1x4x256xf32, #tpu.memory_space<vmem>>, vector<1x4x16xf32>
    %161 = vector.shape_cast %160 : vector<1x4x16xf32> to vector<4x16xf32>
    %162 = vector.shape_cast %159 : vector<4x16xf32> to vector<1x4x16xf32>
    tpu.vector_store %arg14[%c0_102, %c0_103, %c16], %162 {strides = array<i32>} : memref<1x4x256xf32, #tpu.memory_space<vmem>>, vector<1x4x16xf32>,
    %163 = vector.extract_strided_slice %154 {offsets = [0, 36], sizes = [4, 16], strides = [1, 1]} : vector<8x288xf32> to vector<4x16xf32>
    %c0_104 = arith.constant 0 : index
    %c0_105 = arith.constant 0 : index
    %c32 = arith.constant 32 : index
    %164 = vector.load %arg14[%c0_104, %c0_105, %c32] : memref<1x4x256xf32, #tpu.memory_space<vmem>>, vector<1x4x16xf32>
    %165 = vector.shape_cast %164 : vector<1x4x16xf32> to vector<4x16xf32>
    %166 = vector.shape_cast %163 : vector<4x16xf32> to vector<1x4x16xf32>
    tpu.vector_store %arg14[%c0_104, %c0_105, %c32], %166 {strides = array<i32>} : memref<1x4x256xf32, #tpu.memory_space<vmem>>, vector<1x4x16xf32>,
    %167 = vector.extract_strided_slice %154 {offsets = [0, 54], sizes = [4, 16], strides = [1, 1]} : vector<8x288xf32> to vector<4x16xf32>
    %c0_106 = arith.constant 0 : index
    %c0_107 = arith.constant 0 : index
    %c48 = arith.constant 48 : index
    %168 = vector.load %arg14[%c0_106, %c0_107, %c48] : memref<1x4x256xf32, #tpu.memory_space<vmem>>, vector<1x4x16xf32>
    %169 = vector.shape_cast %168 : vector<1x4x16xf32> to vector<4x16xf32>
    %170 = vector.shape_cast %167 : vector<4x16xf32> to vector<1x4x16xf32>
    tpu.vector_store %arg14[%c0_106, %c0_107, %c48], %170 {strides = array<i32>} : memref<1x4x256xf32, #tpu.memory_space<vmem>>, vector<1x4x16xf32>,
    %171 = vector.extract_strided_slice %154 {offsets = [0, 72], sizes = [4, 16], strides = [1, 1]} : vector<8x288xf32> to vector<4x16xf32>
    %c0_108 = arith.constant 0 : index
    %c0_109 = arith.constant 0 : index
    %c64 = arith.constant 64 : index
    %172 = vector.load %arg14[%c0_108, %c0_109, %c64] : memref<1x4x256xf32, #tpu.memory_space<vmem>>, vector<1x4x16xf32>
    %173 = vector.shape_cast %172 : vector<1x4x16xf32> to vector<4x16xf32>
    %174 = vector.shape_cast %171 : vector<4x16xf32> to vector<1x4x16xf32>
    tpu.vector_store %arg14[%c0_108, %c0_109, %c64], %174 {strides = array<i32>} : memref<1x4x256xf32, #tpu.memory_space<vmem>>, vector<1x4x16xf32>,
    %175 = vector.extract_strided_slice %154 {offsets = [0, 90], sizes = [4, 16], strides = [1, 1]} : vector<8x288xf32> to vector<4x16xf32>
    %c0_110 = arith.constant 0 : index
    %c0_111 = arith.constant 0 : index
    %c80 = arith.constant 80 : index
    %176 = vector.load %arg14[%c0_110, %c0_111, %c80] : memref<1x4x256xf32, #tpu.memory_space<vmem>>, vector<1x4x16xf32>
    %177 = vector.shape_cast %176 : vector<1x4x16xf32> to vector<4x16xf32>
    %178 = vector.shape_cast %175 : vector<4x16xf32> to vector<1x4x16xf32>
    tpu.vector_store %arg14[%c0_110, %c0_111, %c80], %178 {strides = array<i32>} : memref<1x4x256xf32, #tpu.memory_space<vmem>>, vector<1x4x16xf32>,
    %179 = vector.extract_strided_slice %154 {offsets = [0, 108], sizes = [4, 16], strides = [1, 1]} : vector<8x288xf32> to vector<4x16xf32>
    %c0_112 = arith.constant 0 : index
    %c0_113 = arith.constant 0 : index
    %c96 = arith.constant 96 : index
    %180 = vector.load %arg14[%c0_112, %c0_113, %c96] : memref<1x4x256xf32, #tpu.memory_space<vmem>>, vector<1x4x16xf32>
    %181 = vector.shape_cast %180 : vector<1x4x16xf32> to vector<4x16xf32>
    %182 = vector.shape_cast %179 : vector<4x16xf32> to vector<1x4x16xf32>
    tpu.vector_store %arg14[%c0_112, %c0_113, %c96], %182 {strides = array<i32>} : memref<1x4x256xf32, #tpu.memory_space<vmem>>, vector<1x4x16xf32>,
    %183 = vector.extract_strided_slice %154 {offsets = [0, 126], sizes = [4, 16], strides = [1, 1]} : vector<8x288xf32> to vector<4x16xf32>
    %c0_114 = arith.constant 0 : index
    %c0_115 = arith.constant 0 : index
    %c112 = arith.constant 112 : index
    %184 = vector.load %arg14[%c0_114, %c0_115, %c112] : memref<1x4x256xf32, #tpu.memory_space<vmem>>, vector<1x4x16xf32>
    %185 = vector.shape_cast %184 : vector<1x4x16xf32> to vector<4x16xf32>
    %186 = vector.shape_cast %183 : vector<4x16xf32> to vector<1x4x16xf32>
    tpu.vector_store %arg14[%c0_114, %c0_115, %c112], %186 {strides = array<i32>} : memref<1x4x256xf32, #tpu.memory_space<vmem>>, vector<1x4x16xf32>,
    %187 = vector.extract_strided_slice %154 {offsets = [0, 144], sizes = [4, 16], strides = [1, 1]} : vector<8x288xf32> to vector<4x16xf32>
    %c0_116 = arith.constant 0 : index
    %c0_117 = arith.constant 0 : index
    %c128 = arith.constant 128 : index
    %188 = vector.load %arg14[%c0_116, %c0_117, %c128] : memref<1x4x256xf32, #tpu.memory_space<vmem>>, vector<1x4x16xf32>
    %189 = vector.shape_cast %188 : vector<1x4x16xf32> to vector<4x16xf32>
    %190 = vector.shape_cast %187 : vector<4x16xf32> to vector<1x4x16xf32>
    tpu.vector_store %arg14[%c0_116, %c0_117, %c128], %190 {strides = array<i32>} : memref<1x4x256xf32, #tpu.memory_space<vmem>>, vector<1x4x16xf32>,
    %191 = vector.extract_strided_slice %154 {offsets = [0, 162], sizes = [4, 16], strides = [1, 1]} : vector<8x288xf32> to vector<4x16xf32>
    %c0_118 = arith.constant 0 : index
    %c0_119 = arith.constant 0 : index
    %c144 = arith.constant 144 : index
    %192 = vector.load %arg14[%c0_118, %c0_119, %c144] : memref<1x4x256xf32, #tpu.memory_space<vmem>>, vector<1x4x16xf32>
    %193 = vector.shape_cast %192 : vector<1x4x16xf32> to vector<4x16xf32>
    %194 = vector.shape_cast %191 : vector<4x16xf32> to vector<1x4x16xf32>
    tpu.vector_store %arg14[%c0_118, %c0_119, %c144], %194 {strides = array<i32>} : memref<1x4x256xf32, #tpu.memory_space<vmem>>, vector<1x4x16xf32>,
    %195 = vector.extract_strided_slice %154 {offsets = [0, 180], sizes = [4, 16], strides = [1, 1]} : vector<8x288xf32> to vector<4x16xf32>
    %c0_120 = arith.constant 0 : index
    %c0_121 = arith.constant 0 : index
    %c160 = arith.constant 160 : index
    %196 = vector.load %arg14[%c0_120, %c0_121, %c160] : memref<1x4x256xf32, #tpu.memory_space<vmem>>, vector<1x4x16xf32>
    %197 = vector.shape_cast %196 : vector<1x4x16xf32> to vector<4x16xf32>
    %198 = vector.shape_cast %195 : vector<4x16xf32> to vector<1x4x16xf32>
    tpu.vector_store %arg14[%c0_120, %c0_121, %c160], %198 {strides = array<i32>} : memref<1x4x256xf32, #tpu.memory_space<vmem>>, vector<1x4x16xf32>,
    %199 = vector.extract_strided_slice %154 {offsets = [0, 198], sizes = [4, 16], strides = [1, 1]} : vector<8x288xf32> to vector<4x16xf32>
    %c0_122 = arith.constant 0 : index
    %c0_123 = arith.constant 0 : index
    %c176 = arith.constant 176 : index
    %200 = vector.load %arg14[%c0_122, %c0_123, %c176] : memref<1x4x256xf32, #tpu.memory_space<vmem>>, vector<1x4x16xf32>
    %201 = vector.shape_cast %200 : vector<1x4x16xf32> to vector<4x16xf32>
    %202 = vector.shape_cast %199 : vector<4x16xf32> to vector<1x4x16xf32>
    tpu.vector_store %arg14[%c0_122, %c0_123, %c176], %202 {strides = array<i32>} : memref<1x4x256xf32, #tpu.memory_space<vmem>>, vector<1x4x16xf32>,
    %203 = vector.extract_strided_slice %154 {offsets = [0, 216], sizes = [4, 16], strides = [1, 1]} : vector<8x288xf32> to vector<4x16xf32>
    %c0_124 = arith.constant 0 : index
    %c0_125 = arith.constant 0 : index
    %c192 = arith.constant 192 : index
    %204 = vector.load %arg14[%c0_124, %c0_125, %c192] : memref<1x4x256xf32, #tpu.memory_space<vmem>>, vector<1x4x16xf32>
    %205 = vector.shape_cast %204 : vector<1x4x16xf32> to vector<4x16xf32>
    %206 = vector.shape_cast %203 : vector<4x16xf32> to vector<1x4x16xf32>
    tpu.vector_store %arg14[%c0_124, %c0_125, %c192], %206 {strides = array<i32>} : memref<1x4x256xf32, #tpu.memory_space<vmem>>, vector<1x4x16xf32>,
    %207 = vector.extract_strided_slice %154 {offsets = [0, 234], sizes = [4, 16], strides = [1, 1]} : vector<8x288xf32> to vector<4x16xf32>
    %c0_126 = arith.constant 0 : index
    %c0_127 = arith.constant 0 : index
    %c208 = arith.constant 208 : index
    %208 = vector.load %arg14[%c0_126, %c0_127, %c208] : memref<1x4x256xf32, #tpu.memory_space<vmem>>, vector<1x4x16xf32>
    %209 = vector.shape_cast %208 : vector<1x4x16xf32> to vector<4x16xf32>
    %210 = vector.shape_cast %207 : vector<4x16xf32> to vector<1x4x16xf32>
    tpu.vector_store %arg14[%c0_126, %c0_127, %c208], %210 {strides = array<i32>} : memref<1x4x256xf32, #tpu.memory_space<vmem>>, vector<1x4x16xf32>,
    %211 = vector.extract_strided_slice %154 {offsets = [0, 252], sizes = [4, 16], strides = [1, 1]} : vector<8x288xf32> to vector<4x16xf32>
    %c0_128 = arith.constant 0 : index
    %c0_129 = arith.constant 0 : index
    %c224 = arith.constant 224 : index
    %212 = vector.load %arg14[%c0_128, %c0_129, %c224] : memref<1x4x256xf32, #tpu.memory_space<vmem>>, vector<1x4x16xf32>
    %213 = vector.shape_cast %212 : vector<1x4x16xf32> to vector<4x16xf32>
    %214 = vector.shape_cast %211 : vector<4x16xf32> to vector<1x4x16xf32>
    tpu.vector_store %arg14[%c0_128, %c0_129, %c224], %214 {strides = array<i32>} : memref<1x4x256xf32, #tpu.memory_space<vmem>>, vector<1x4x16xf32>,
    %215 = vector.extract_strided_slice %154 {offsets = [0, 270], sizes = [4, 16], strides = [1, 1]} : vector<8x288xf32> to vector<4x16xf32>
    %c0_130 = arith.constant 0 : index
    %c0_131 = arith.constant 0 : index
    %c240 = arith.constant 240 : index
    %216 = vector.load %arg14[%c0_130, %c0_131, %c240] : memref<1x4x256xf32, #tpu.memory_space<vmem>>, vector<1x4x16xf32>
    %217 = vector.shape_cast %216 : vector<1x4x16xf32> to vector<4x16xf32>
    %218 = vector.shape_cast %215 : vector<4x16xf32> to vector<1x4x16xf32>
    tpu.vector_store %arg14[%c0_130, %c0_131, %c240], %218 {strides = array<i32>} : memref<1x4x256xf32, #tpu.memory_space<vmem>>, vector<1x4x16xf32>,
    return
  }
  func.func @transform_0(%arg0: i32) -> (i32, i32, i32) {
    %c0_i32 = arith.constant 0 : i32
    %c0_i32_0 = arith.constant 0 : i32
    %c0_i32_1 = arith.constant 0 : i32
    return %arg0, %c0_i32, %c0_i32_0 : i32, i32, i32
  }
  func.func @transform_1(%arg0: i32) -> (i32, i32, i32) {
    %c0_i32 = arith.constant 0 : i32
    %c0_i32_0 = arith.constant 0 : i32
    %c0_i32_1 = arith.constant 0 : i32
    return %arg0, %c0_i32, %c0_i32_0 : i32, i32, i32
  }
  func.func @transform_2(%arg0: i32) -> (i32, i32) {
    %c0_i32 = arith.constant 0 : i32
    %c0_i32_0 = arith.constant 0 : i32
    %c0_i32_1 = arith.constant 0 : i32
    return %c0_i32, %c0_i32_0 : i32, i32
  }
  func.func @transform_3(%arg0: i32) -> (i32, i32) {
    %c0_i32 = arith.constant 0 : i32
    %c0_i32_0 = arith.constant 0 : i32
    %c0_i32_1 = arith.constant 0 : i32
    return %c0_i32, %c0_i32_0 : i32, i32
  }
  func.func @transform_4(%arg0: i32) -> (i32, i32) {
    %c0_i32 = arith.constant 0 : i32
    %c0_i32_0 = arith.constant 0 : i32
    %c0_i32_1 = arith.constant 0 : i32
    return %c0_i32, %c0_i32_0 : i32, i32
  }
  func.func @transform_5(%arg0: i32) -> (i32, i32) {
    %c0_i32 = arith.constant 0 : i32
    %c0_i32_0 = arith.constant 0 : i32
    %c0_i32_1 = arith.constant 0 : i32
    return %c0_i32, %c0_i32_0 : i32, i32
  }
  func.func @transform_6(%arg0: i32) -> (i32, i32) {
    %c0_i32 = arith.constant 0 : i32
    %c0_i32_0 = arith.constant 0 : i32
    %c0_i32_1 = arith.constant 0 : i32
    return %c0_i32, %c0_i32_0 : i32, i32
  }
  func.func @transform_7(%arg0: i32) -> (i32, i32) {
    %c0_i32 = arith.constant 0 : i32
    %c0_i32_0 = arith.constant 0 : i32
    %c0_i32_1 = arith.constant 0 : i32
    return %c0_i32, %c0_i32_0 : i32, i32
  }
  func.func @transform_8(%arg0: i32) -> (i32, i32) {
    %c0_i32 = arith.constant 0 : i32
    %c0_i32_0 = arith.constant 0 : i32
    %c0_i32_1 = arith.constant 0 : i32
    return %c0_i32, %c0_i32_0 : i32, i32
  }
  func.func @transform_9(%arg0: i32) -> (i32, i32) {
    %c0_i32 = arith.constant 0 : i32
    %c0_i32_0 = arith.constant 0 : i32
    %c0_i32_1 = arith.constant 0 : i32
    return %c0_i32, %c0_i32_0 : i32, i32
  }
  func.func @transform_10(%arg0: i32) -> (i32, i32, i32) {
    %c0_i32 = arith.constant 0 : i32
    %c0_i32_0 = arith.constant 0 : i32
    %c0_i32_1 = arith.constant 0 : i32
    return %arg0, %c0_i32, %c0_i32_0 : i32, i32, i32
  }
  func.func @transform_11(%arg0: i32) -> (i32, i32) {
    %c0_i32 = arith.constant 0 : i32
    %c0_i32_0 = arith.constant 0 : i32
    %c0_i32_1 = arith.constant 0 : i32
    return %c0_i32, %c0_i32_0 : i32, i32
  }
  func.func @transform_12(%arg0: i32) -> (i32, i32) {
    %c0_i32 = arith.constant 0 : i32
    %c0_i32_0 = arith.constant 0 : i32
    %c0_i32_1 = arith.constant 0 : i32
    return %c0_i32, %c0_i32_0 : i32, i32
  }
  func.func @transform_13(%arg0: i32) -> (i32, i32, i32) {
    %c0_i32 = arith.constant 0 : i32
    %c0_i32_0 = arith.constant 0 : i32
    %c0_i32_1 = arith.constant 0 : i32
    return %arg0, %c0_i32, %c0_i32_0 : i32, i32, i32
  }
}

</mosaic_0001>

<llo_original>
// kernel: up_forward.1
$region0: #{up_forward.1}
  #allocation0 [shape = 'u32[]', space=smem, size = 0x4, offset = 0x4, fixed_abs, tag = 'smem constant byte address 0x4 - core index']
  #allocation1 [shape = 'u32[72,128]{1,0:T(1,128)}', space=vmem, size = 0x9000, scoped, tag = 'internal scratch']
  #allocation2 [shape = 'f32[8,326]{1,0:T(8,128)}', space=vmem, size = 0x3000, scoped, tag = 'scratch operand']
  %s0 = inlined_call_operand.vmem [shape: bf16[2,4,64], index: 0, kind: input, shape index: {}]
  %s1 = inlined_call_operand.vmem [shape: bf16[2,4,256], index: 1, kind: input, shape index: {}]
  %s2 = inlined_call_operand.vmem [shape: bf16[64,288], index: 2, kind: input, shape index: {}]
  %s3 = inlined_call_operand.vmem [shape: f32[1,288], index: 3, kind: input, shape index: {}]
  %s4 = inlined_call_operand.vmem [shape: bf16[8,72], index: 4, kind: input, shape index: {}]
  %s5 = inlined_call_operand.vmem [shape: f32[8,1], index: 5, kind: input, shape index: {}]
  %s6 = inlined_call_operand.vmem [shape: f32[8,1], index: 6, kind: input, shape index: {}]
  %s7 = inlined_call_operand.vmem [shape: bf16[8,72], index: 7, kind: input, shape index: {}]
  %s8 = inlined_call_operand.vmem [shape: f32[8,1], index: 8, kind: input, shape index: {}]
  %s9 = inlined_call_operand.vmem [shape: f32[8,1], index: 9, kind: input, shape index: {}]
  %s10 = inlined_call_operand.vmem [shape: f32[2,1,4], index: 10, kind: input, shape index: {}]
  %s11 = inlined_call_operand.vmem [shape: f32[8,4], index: 11, kind: input, shape index: {}]
  %s12 = inlined_call_operand.vmem [shape: f32[8,1], index: 12, kind: input, shape index: {}]
  %s13 = inlined_call_operand.vmem [shape: f32[2,4,256], index: 13, kind: output, shape index: {}]
  %s14 = sld [smem:[#allocation0]]
  $region85: #{up_forward.1} parent=0
    _
  %s16 = ssub.s32 1, %s14
  %s17 = scalar_select 0, %s16, %s14
  loop: start=0, step=1, limit=4
  $region2: #{up_forward.1} parent=0 // loop_pre_header
    _
  $region3: #{up_forward.1} parent=0 // loop_header
    %s19 = sphi 0, %s23
    %p20 = scmp.ge.s32.totalorder %s19, 4
    %s29 = sphi 0, %s31
    %s32 = sphi 0, %s29
    %s33 = sphi 0, %s32
    %s49 = sphi 0, %s33
    %s55 = sphi 0, %s57
    %s58 = sphi 0, %s55
    %s59 = sphi 0, %s58
    %s75 = sphi 0, %s59
    %s79 = sphi 0, %s79
    %s81 = sphi 0, %s79
    %s82 = sphi 0, %s81
    %s96 = sphi 0, %s82
    %s100 = sphi 0, %s100
    %s102 = sphi 0, %s100
    %s103 = sphi 0, %s102
    %s117 = sphi 0, %s103
    %s121 = sphi 0, %s121
    %s123 = sphi 0, %s121
    %s124 = sphi 0, %s123
    %s138 = sphi 0, %s124
    %s142 = sphi 0, %s142
    %s144 = sphi 0, %s142
    %s145 = sphi 0, %s144
    %s159 = sphi 0, %s145
    %s163 = sphi 0, %s163
    %s165 = sphi 0, %s163
    %s166 = sphi 0, %s165
    %s180 = sphi 0, %s166
    %s184 = sphi 0, %s184
    %s186 = sphi 0, %s184
    %s187 = sphi 0, %s186
    %s201 = sphi 0, %s187
    %s205 = sphi 0, %s205
    %s207 = sphi 0, %s205
    %s208 = sphi 0, %s207
    %s222 = sphi 0, %s208
    %s226 = sphi 0, %s226
    %s228 = sphi 0, %s226
    %s229 = sphi 0, %s228
    %s243 = sphi 0, %s229
    %s249 = sphi 0, %s251
    %s252 = sphi 0, %s249
    %s253 = sphi 0, %s252
    %s269 = sphi 0, %s253
    %s273 = sphi 0, %s273
    %s275 = sphi 0, %s273
    %s276 = sphi 0, %s275
    %s290 = sphi 0, %s276
    %s294 = sphi 0, %s294
    %s296 = sphi 0, %s294
    %s297 = sphi 0, %s296
    %s311 = sphi 0, %s297
    %s317 = sphi 0, %s319
    %s320 = sphi 0, %s317
    %s321 = sphi 0, %s320
    %s337 = sphi 0, %s321
  $region4: #{up_forward.1} parent=0 // loop_header_branch
    %22 = sbr.rel (%p20) target = $region8
  $region5: #{up_forward.1} parent=0 // loop_body
    %s24 = ssub.s32 %s19, 1
    %s25 = ssub.s32 %s19, 2
    %s26 = sadd.s32 %s19, 1
    %s27 = ssub.s32 %s19, %s26
    %p28 = scmp.eq.s32.totalorder %s27, 0
    %s30 = sadd.s32 %s29, 1
    %s31 = scalar_select %p28, %s29, %s30
    %p34 = pneg %p28
    %p35 = scmp.eq.s32.totalorder %s19, 1
    %p36 = por %p34, %p35
    %p37 = scmp.ne.s32.totalorder %s29, %s32
    %p38 = scmp.eq.s32.totalorder %s19, 0
    %p39 = por %p37, %p38
    %p40 = scmp.ne.s32.totalorder %s29, %s32
    %p41 = scmp.eq.s32.totalorder %s24, 1
    %p42 = por %p40, %p41
    %p43 = scmp.ne.s32.totalorder %s32, %s33
    %p44 = scmp.eq.s32.totalorder %s24, 0
    %p45 = por %p43, %p44
    %p46 = scmp.ne.s32.totalorder %s32, %s33
    %p47 = scmp.eq.s32.totalorder %s25, 1
    %p48 = por %p46, %p47
    %p50 = scmp.ne.s32.totalorder %s33, %s49
    %p51 = scmp.eq.s32.totalorder %s25, 0
    %p52 = por %p50, %p51
    %s53 = ssub.s32 %s19, %s26
    %p54 = scmp.eq.s32.totalorder %s53, 0
    %s56 = sadd.s32 %s55, 1
    %s57 = scalar_select %p54, %s55, %s56
    %p60 = pneg %p54
    %p61 = scmp.eq.s32.totalorder %s19, 1
    %p62 = por %p60, %p61
    %p63 = scmp.ne.s32.totalorder %s55, %s58
    %p64 = scmp.eq.s32.totalorder %s19, 0
    %p65 = por %p63, %p64
    %p66 = scmp.ne.s32.totalorder %s55, %s58
    %p67 = scmp.eq.s32.totalorder %s24, 1
    %p68 = por %p66, %p67
    %p69 = scmp.ne.s32.totalorder %s58, %s59
    %p70 = scmp.eq.s32.totalorder %s24, 0
    %p71 = por %p69, %p70
    %p72 = scmp.ne.s32.totalorder %s58, %s59
    %p73 = scmp.eq.s32.totalorder %s25, 1
    %p74 = por %p72, %p73
    %p76 = scmp.ne.s32.totalorder %s59, %s75
    %p77 = scmp.eq.s32.totalorder %s25, 0
    %p78 = por %p76, %p77
    %s80 = sadd.s32 %s79, 1
    %p83 = scmp.eq.s32.totalorder %s19, 1
    %p84 = scmp.ne.s32.totalorder %s79, %s81
    %p85 = scmp.eq.s32.totalorder %s19, 0
    %p86 = por %p84, %p85
    %p87 = scmp.ne.s32.totalorder %s79, %s81
    %p88 = scmp.eq.s32.totalorder %s24, 1
    %p89 = por %p87, %p88
    %p90 = scmp.ne.s32.totalorder %s81, %s82
    %p91 = scmp.eq.s32.totalorder %s24, 0
    %p92 = por %p90, %p91
    %p93 = scmp.ne.s32.totalorder %s81, %s82
    %p94 = scmp.eq.s32.totalorder %s25, 1
    %p95 = por %p93, %p94
    %p97 = scmp.ne.s32.totalorder %s82, %s96
    %p98 = scmp.eq.s32.totalorder %s25, 0
    %p99 = por %p97, %p98
    %s101 = sadd.s32 %s100, 1
    %p104 = scmp.eq.s32.totalorder %s19, 1
    %p105 = scmp.ne.s32.totalorder %s100, %s102
    %p106 = scmp.eq.s32.totalorder %s19, 0
    %p107 = por %p105, %p106
    %p108 = scmp.ne.s32.totalorder %s100, %s102
    %p109 = scmp.eq.s32.totalorder %s24, 1
    %p110 = por %p108, %p109
    %p111 = scmp.ne.s32.totalorder %s102, %s103
    %p112 = scmp.eq.s32.totalorder %s24, 0
    %p113 = por %p111, %p112
    %p114 = scmp.ne.s32.totalorder %s102, %s103
    %p115 = scmp.eq.s32.totalorder %s25, 1
    %p116 = por %p114, %p115
    %p118 = scmp.ne.s32.totalorder %s103, %s117
    %p119 = scmp.eq.s32.totalorder %s25, 0
    %p120 = por %p118, %p119
    %s122 = sadd.s32 %s121, 1
    %p125 = scmp.eq.s32.totalorder %s19, 1
    %p126 = scmp.ne.s32.totalorder %s121, %s123
    %p127 = scmp.eq.s32.totalorder %s19, 0
    %p128 = por %p126, %p127
    %p129 = scmp.ne.s32.totalorder %s121, %s123
    %p130 = scmp.eq.s32.totalorder %s24, 1
    %p131 = por %p129, %p130
    %p132 = scmp.ne.s32.totalorder %s123, %s124
    %p133 = scmp.eq.s32.totalorder %s24, 0
    %p134 = por %p132, %p133
    %p135 = scmp.ne.s32.totalorder %s123, %s124
    %p136 = scmp.eq.s32.totalorder %s25, 1
    %p137 = por %p135, %p136
    %p139 = scmp.ne.s32.totalorder %s124, %s138
    %p140 = scmp.eq.s32.totalorder %s25, 0
    %p141 = por %p139, %p140
    %s143 = sadd.s32 %s142, 1
    %p146 = scmp.eq.s32.totalorder %s19, 1
    %p147 = scmp.ne.s32.totalorder %s142, %s144
    %p148 = scmp.eq.s32.totalorder %s19, 0
    %p149 = por %p147, %p148
    %p150 = scmp.ne.s32.totalorder %s142, %s144
    %p151 = scmp.eq.s32.totalorder %s24, 1
    %p152 = por %p150, %p151
    %p153 = scmp.ne.s32.totalorder %s144, %s145
    %p154 = scmp.eq.s32.totalorder %s24, 0
    %p155 = por %p153, %p154
    %p156 = scmp.ne.s32.totalorder %s144, %s145
    %p157 = scmp.eq.s32.totalorder %s25, 1
    %p158 = por %p156, %p157
    %p160 = scmp.ne.s32.totalorder %s145, %s159
    %p161 = scmp.eq.s32.totalorder %s25, 0
    %p162 = por %p160, %p161
    %s164 = sadd.s32 %s163, 1
    %p167 = scmp.eq.s32.totalorder %s19, 1
    %p168 = scmp.ne.s32.totalorder %s163, %s165
    %p169 = scmp.eq.s32.totalorder %s19, 0
    %p170 = por %p168, %p169
    %p171 = scmp.ne.s32.totalorder %s163, %s165
    %p172 = scmp.eq.s32.totalorder %s24, 1
    %p173 = por %p171, %p172
    %p174 = scmp.ne.s32.totalorder %s165, %s166
    %p175 = scmp.eq.s32.totalorder %s24, 0
    %p176 = por %p174, %p175
    %p177 = scmp.ne.s32.totalorder %s165, %s166
    %p178 = scmp.eq.s32.totalorder %s25, 1
    %p179 = por %p177, %p178
    %p181 = scmp.ne.s32.totalorder %s166, %s180
    %p182 = scmp.eq.s32.totalorder %s25, 0
    %p183 = por %p181, %p182
    %s185 = sadd.s32 %s184, 1
    %p188 = scmp.eq.s32.totalorder %s19, 1
    %p189 = scmp.ne.s32.totalorder %s184, %s186
    %p190 = scmp.eq.s32.totalorder %s19, 0
    %p191 = por %p189, %p190
    %p192 = scmp.ne.s32.totalorder %s184, %s186
    %p193 = scmp.eq.s32.totalorder %s24, 1
    %p194 = por %p192, %p193
    %p195 = scmp.ne.s32.totalorder %s186, %s187
    %p196 = scmp.eq.s32.totalorder %s24, 0
    %p197 = por %p195, %p196
    %p198 = scmp.ne.s32.totalorder %s186, %s187
    %p199 = scmp.eq.s32.totalorder %s25, 1
    %p200 = por %p198, %p199
    %p202 = scmp.ne.s32.totalorder %s187, %s201
    %p203 = scmp.eq.s32.totalorder %s25, 0
    %p204 = por %p202, %p203
    %s206 = sadd.s32 %s205, 1
    %p209 = scmp.eq.s32.totalorder %s19, 1
    %p210 = scmp.ne.s32.totalorder %s205, %s207
    %p211 = scmp.eq.s32.totalorder %s19, 0
    %p212 = por %p210, %p211
    %p213 = scmp.ne.s32.totalorder %s205, %s207
    %p214 = scmp.eq.s32.totalorder %s24, 1
    %p215 = por %p213, %p214
    %p216 = scmp.ne.s32.totalorder %s207, %s208
    %p217 = scmp.eq.s32.totalorder %s24, 0
    %p218 = por %p216, %p217
    %p219 = scmp.ne.s32.totalorder %s207, %s208
    %p220 = scmp.eq.s32.totalorder %s25, 1
    %p221 = por %p219, %p220
    %p223 = scmp.ne.s32.totalorder %s208, %s222
    %p224 = scmp.eq.s32.totalorder %s25, 0
    %p225 = por %p223, %p224
    %s227 = sadd.s32 %s226, 1
    %p230 = scmp.eq.s32.totalorder %s19, 1
    %p231 = scmp.ne.s32.totalorder %s226, %s228
    %p232 = scmp.eq.s32.totalorder %s19, 0
    %p233 = por %p231, %p232
    %p234 = scmp.ne.s32.totalorder %s226, %s228
    %p235 = scmp.eq.s32.totalorder %s24, 1
    %p236 = por %p234, %p235
    %p237 = scmp.ne.s32.totalorder %s228, %s229
    %p238 = scmp.eq.s32.totalorder %s24, 0
    %p239 = por %p237, %p238
    %p240 = scmp.ne.s32.totalorder %s228, %s229
    %p241 = scmp.eq.s32.totalorder %s25, 1
    %p242 = por %p240, %p241
    %p244 = scmp.ne.s32.totalorder %s229, %s243
    %p245 = scmp.eq.s32.totalorder %s25, 0
    %p246 = por %p244, %p245
    %s247 = ssub.s32 %s19, %s26
    %p248 = scmp.eq.s32.totalorder %s247, 0
    %s250 = sadd.s32 %s249, 1
    %s251 = scalar_select %p248, %s249, %s250
    %p254 = pneg %p248
    %p255 = scmp.eq.s32.totalorder %s19, 1
    %p256 = por %p254, %p255
    %p257 = scmp.ne.s32.totalorder %s249, %s252
    %p258 = scmp.eq.s32.totalorder %s19, 0
    %p259 = por %p257, %p258
    %p260 = scmp.ne.s32.totalorder %s249, %s252
    %p261 = scmp.eq.s32.totalorder %s24, 1
    %p262 = por %p260, %p261
    %p263 = scmp.ne.s32.totalorder %s252, %s253
    %p264 = scmp.eq.s32.totalorder %s24, 0
    %p265 = por %p263, %p264
    %p266 = scmp.ne.s32.totalorder %s252, %s253
    %p267 = scmp.eq.s32.totalorder %s25, 1
    %p268 = por %p266, %p267
    %p270 = scmp.ne.s32.totalorder %s253, %s269
    %p271 = scmp.eq.s32.totalorder %s25, 0
    %p272 = por %p270, %p271
    %s274 = sadd.s32 %s273, 1
    %p277 = scmp.eq.s32.totalorder %s19, 1
    %p278 = scmp.ne.s32.totalorder %s273, %s275
    %p279 = scmp.eq.s32.totalorder %s19, 0
    %p280 = por %p278, %p279
    %p281 = scmp.ne.s32.totalorder %s273, %s275
    %p282 = scmp.eq.s32.totalorder %s24, 1
    %p283 = por %p281, %p282
    %p284 = scmp.ne.s32.totalorder %s275, %s276
    %p285 = scmp.eq.s32.totalorder %s24, 0
    %p286 = por %p284, %p285
    %p287 = scmp.ne.s32.totalorder %s275, %s276
    %p288 = scmp.eq.s32.totalorder %s25, 1
    %p289 = por %p287, %p288
    %p291 = scmp.ne.s32.totalorder %s276, %s290
    %p292 = scmp.eq.s32.totalorder %s25, 0
    %p293 = por %p291, %p292
    %s295 = sadd.s32 %s294, 1
    %p298 = scmp.eq.s32.totalorder %s19, 1
    %p299 = scmp.ne.s32.totalorder %s294, %s296
    %p300 = scmp.eq.s32.totalorder %s19, 0
    %p301 = por %p299, %p300
    %p302 = scmp.ne.s32.totalorder %s294, %s296
    %p303 = scmp.eq.s32.totalorder %s24, 1
    %p304 = por %p302, %p303
    %p305 = scmp.ne.s32.totalorder %s296, %s297
    %p306 = scmp.eq.s32.totalorder %s24, 0
    %p307 = por %p305, %p306
    %p308 = scmp.ne.s32.totalorder %s296, %s297
    %p309 = scmp.eq.s32.totalorder %s25, 1
    %p310 = por %p308, %p309
    %p312 = scmp.ne.s32.totalorder %s297, %s311
    %p313 = scmp.eq.s32.totalorder %s25, 0
    %p314 = por %p312, %p313
    %s315 = ssub.s32 %s19, %s26
    %p316 = scmp.eq.s32.totalorder %s315, 0
    %s318 = sadd.s32 %s317, 1
    %s319 = scalar_select %p316, %s317, %s318
    %p322 = pneg %p316
    %p323 = scmp.eq.s32.totalorder %s19, 1
    %p324 = por %p322, %p323
    %p325 = scmp.ne.s32.totalorder %s317, %s320
    %p326 = scmp.eq.s32.totalorder %s19, 0
    %p327 = por %p325, %p326
    %p328 = scmp.ne.s32.totalorder %s317, %s320
    %p329 = scmp.eq.s32.totalorder %s24, 1
    %p330 = por %p328, %p329
    %p331 = scmp.ne.s32.totalorder %s320, %s321
    %p332 = scmp.eq.s32.totalorder %s24, 0
    %p333 = por %p331, %p332
    %p334 = scmp.ne.s32.totalorder %s320, %s321
    %p335 = scmp.eq.s32.totalorder %s25, 1
    %p336 = por %p334, %p335
    %p338 = scmp.ne.s32.totalorder %s321, %s337
    %p339 = scmp.eq.s32.totalorder %s25, 0
    %p340 = por %p338, %p339
    %p341 = scmp.le.s32.totalorder 1, %s19
    %p342 = scmp.lt.s32.totalorder %s19, 3
    %p343 = pnand %p341, %p342
    %p344 = pneg %p343
    // Predicated region
    $region9: #{up_forward.1} parent=5 // pred_check
      _
    $region10: #{up_forward.1} parent=5 // pred_check_branch
      %346 = sbr.rel (%p343) target = $region12
    $region11: #{up_forward.1} parent=5 // pred_region
      %s347 = ssub.s32 %s19, 1
      // Predicated region
      $region13: #{up_forward.1} parent=11 // pred_check
        %p348 = pneg %p92
      $region14: #{up_forward.1} parent=11 // pred_check_branch
        %350 = sbr.rel (%p348) target = $region16
      $region15: #{up_forward.1} parent=11 // pred_region
        _
      $region16: #{up_forward.1} parent=11 // pred_fallthru
        _
      // Predicated region
      $region17: #{up_forward.1} parent=11 // pred_check
        %p351 = pneg %p113
      $region18: #{up_forward.1} parent=11 // pred_check_branch
        %353 = sbr.rel (%p351) target = $region20
      $region19: #{up_forward.1} parent=11 // pred_region
        _
      $region20: #{up_forward.1} parent=11 // pred_fallthru
        _
      // Predicated region
      $region21: #{up_forward.1} parent=11 // pred_check
        %p354 = pneg %p134
      $region22: #{up_forward.1} parent=11 // pred_check_branch
        %356 = sbr.rel (%p354) target = $region24
      $region23: #{up_forward.1} parent=11 // pred_region
        _
      $region24: #{up_forward.1} parent=11 // pred_fallthru
        _
      // Predicated region
      $region25: #{up_forward.1} parent=11 // pred_check
        %p357 = pneg %p155
      $region26: #{up_forward.1} parent=11 // pred_check_branch
        %359 = sbr.rel (%p357) target = $region28
      $region27: #{up_forward.1} parent=11 // pred_region
        _
      $region28: #{up_forward.1} parent=11 // pred_fallthru
        _
      // Predicated region
      $region29: #{up_forward.1} parent=11 // pred_check
        %p360 = pneg %p176
      $region30: #{up_forward.1} parent=11 // pred_check_branch
        %362 = sbr.rel (%p360) target = $region32
      $region31: #{up_forward.1} parent=11 // pred_region
        _
      $region32: #{up_forward.1} parent=11 // pred_fallthru
        _
      // Predicated region
      $region33: #{up_forward.1} parent=11 // pred_check
        %p363 = pneg %p197
      $region34: #{up_forward.1} parent=11 // pred_check_branch
        %365 = sbr.rel (%p363) target = $region36
      $region35: #{up_forward.1} parent=11 // pred_region
        _
      $region36: #{up_forward.1} parent=11 // pred_fallthru
        _
      // Predicated region
      $region37: #{up_forward.1} parent=11 // pred_check
        %p366 = pneg %p218
      $region38: #{up_forward.1} parent=11 // pred_check_branch
        %368 = sbr.rel (%p366) target = $region40
      $region39: #{up_forward.1} parent=11 // pred_region
        _
      $region40: #{up_forward.1} parent=11 // pred_fallthru
        _
      // Predicated region
      $region41: #{up_forward.1} parent=11 // pred_check
        %p369 = pneg %p239
      $region42: #{up_forward.1} parent=11 // pred_check_branch
        %371 = sbr.rel (%p369) target = $region44
      $region43: #{up_forward.1} parent=11 // pred_region
        _
      $region44: #{up_forward.1} parent=11 // pred_fallthru
        _
      // Predicated region
      $region45: #{up_forward.1} parent=11 // pred_check
        %p372 = pneg %p286
      $region46: #{up_forward.1} parent=11 // pred_check_branch
        %374 = sbr.rel (%p372) target = $region48
      $region47: #{up_forward.1} parent=11 // pred_region
        _
      $region48: #{up_forward.1} parent=11 // pred_fallthru
        _
      // Predicated region
      $region49: #{up_forward.1} parent=11 // pred_check
        %p375 = pneg %p307
      $region50: #{up_forward.1} parent=11 // pred_check_branch
        %377 = sbr.rel (%p375) target = $region52
      $region51: #{up_forward.1} parent=11 // pred_region
        _
      $region52: #{up_forward.1} parent=11 // pred_fallthru
        _
    $region12: #{up_forward.1} parent=5 // pred_fallthru
      _
    %p378 = scmp.lt.s32.totalorder %s19, 2
    // Predicated region
    $region53: #{up_forward.1} parent=5 // pred_check
      %p379 = pneg %p378
    $region54: #{up_forward.1} parent=5 // pred_check_branch
      %381 = sbr.rel (%p379) target = $region56
    $region55: #{up_forward.1} parent=5 // pred_region
      // Predicated region
      $region57: #{up_forward.1} parent=55 // pred_check
        %p382 = pneg %p39
      $region58: #{up_forward.1} parent=55 // pred_check_branch
        %384 = sbr.rel (%p382) target = $region60
      $region59: #{up_forward.1} parent=55 // pred_region
        %p385 = scmp.lt.s32.totalorder %s19, 1
        %s386 = scalar_select %p385, %s19, 1
        %s387 = smul.addr %s386, 2
        %s388 = scalar_lea.vmem %s0, %s387
      $region60: #{up_forward.1} parent=55 // pred_fallthru
        _
      // Predicated region
      $region61: #{up_forward.1} parent=55 // pred_check
        %p389 = pneg %p65
      $region62: #{up_forward.1} parent=55 // pred_check_branch
        %391 = sbr.rel (%p389) target = $region64
      $region63: #{up_forward.1} parent=55 // pred_region
        %p392 = scmp.lt.s32.totalorder %s19, 1
        %s393 = scalar_select %p392, %s19, 1
        %s394 = smul.addr %s393, 2
        %s395 = smul.addr %s394, 2
        %s396 = scalar_lea.vmem %s1, %s395
      $region64: #{up_forward.1} parent=55 // pred_fallthru
        _
      // Predicated region
      $region65: #{up_forward.1} parent=55 // pred_check
        %p397 = pneg %p259
      $region66: #{up_forward.1} parent=55 // pred_check_branch
        %399 = sbr.rel (%p397) target = $region68
      $region67: #{up_forward.1} parent=55 // pred_region
        %p400 = scmp.lt.s32.totalorder %s19, 1
        %s401 = scalar_select %p400, %s19, 1
        %s402 = scalar_lea.vmem %s10, %s401
      $region68: #{up_forward.1} parent=55 // pred_fallthru
        _
    $region56: #{up_forward.1} parent=5 // pred_fallthru
      _
    %p403 = scmp.le.s32.totalorder 1, %s19
    %p404 = scmp.lt.s32.totalorder %s19, 3
    %p405 = pnand %p403, %p404
    %p406 = pneg %p405
    // Predicated region
    $region69: #{up_forward.1} parent=5 // pred_check
      _
    $region70: #{up_forward.1} parent=5 // pred_check_branch
      %408 = sbr.rel (%p405) target = $region72
    $region71: #{up_forward.1} parent=5 // pred_region
      %s409 = ssub.s32 %s19, 1
      %p410 = scmp.lt.s32.totalorder %s24, 1
      %s411 = scalar_select %p410, %s24, 1
      %s412 = smul.addr %s411, 2
      %s413 = scalar_lea.vmem %s0, %s412
      %p414 = pneg %p45
      %p415 = pneg %p42
      %p416 = scmp.lt.s32.totalorder %s24, 1
      %s417 = scalar_select %p416, %s24, 1
      %s418 = smul.addr %s417, 2
      %s419 = smul.addr %s418, 2
      %s420 = scalar_lea.vmem %s1, %s419
      %p421 = pneg %p71
      %p422 = pneg %p68
      %p423 = pneg %p92
      %p424 = pneg %p89
      %p425 = pneg %p113
      %p426 = pneg %p110
      %p427 = pneg %p134
      %p428 = pneg %p131
      %p429 = pneg %p155
      %p430 = pneg %p152
      %p431 = pneg %p176
      %p432 = pneg %p173
      %p433 = pneg %p197
      %p434 = pneg %p194
      %p435 = pneg %p218
      %p436 = pneg %p215
      %p437 = pneg %p239
      %p438 = pneg %p236
      %p439 = scmp.lt.s32.totalorder %s24, 1
      %s440 = scalar_select %p439, %s24, 1
      %s441 = scalar_lea.vmem %s10, %s440
      %p442 = pneg %p265
      %p443 = pneg %p262
      %p444 = pneg %p286
      %p445 = pneg %p283
      %p446 = pneg %p307
      %p447 = pneg %p304
      %p448 = pneg %p333
      %p449 = pneg %p330
      %p450 = scmp.lt.s32.totalorder %s24, 1
      %s451 = scalar_select %p450, %s24, 1
      %s452 = smul.addr %s451, 2
      %s453 = smul.addr %s452, 4
      %s454 = scalar_lea.vmem %s13, %s453
      %p455 = scmp.lt.s32.totalorder %s24, 1
      %s456 = scalar_select %p455, %s24, 1
      %s457 = smul.addr %s456, 2
      %s458 = scalar_lea.vmem %s0, %s457
      %p459 = scmp.lt.s32.totalorder %s24, 1
      %s460 = scalar_select %p459, %s24, 1
      %s461 = smul.addr %s460, 2
      %s462 = smul.addr %s461, 2
      %s463 = scalar_lea.vmem %s1, %s462
      %p464 = scmp.lt.s32.totalorder %s24, 1
      %s465 = scalar_select %p464, %s24, 1
      %s466 = scalar_lea.vmem %s10, %s465
      %p467 = scmp.lt.s32.totalorder %s24, 1
      %s468 = scalar_select %p467, %s24, 1
      %s469 = smul.addr %s468, 2
      %s470 = smul.addr %s469, 4
      %s471 = scalar_lea.vmem %s13, %s470
      %v473 = vld [vmem:[%s3] sm:$0x7]
      %474 = vst [vmem:[#allocation2] sm:$0xff] 0.0
      %475 = vst [vmem:[#allocation2 + $0x8] sm:$0xff] 0.0
      %vm476 = vcmask 572416
      %477 = vst.msk [vmem:[#allocation2 + $0x10] sm:$0xff] %vm476, 0.0
      %v478 = vld [vmem:[%s463] sm:$0xf]
      %v479 = vunpack.c.l.bf16 %v478
      %481 = vst [vmem:[#allocation1] ss:$2 sm:$0xff] %v479
      %v482 = vld.sshfl [vmem:[#allocation1] sm:$0xff pattern:$0x75316420]
      %483 = vrot.lane.b32.xlu0 %v482, 19
      %v484 = vpop.permute.xlu0 %483
      %vm486 = vcmask 281752
      %487 = vst.msk [vmem:[#allocation2] sm:$0xf] %vm486, %v484
      %488 = vst [vmem:[#allocation1] ss:$2 sm:$0xff] %v479
      %v489 = vld.sshfl [vmem:[#allocation1] sm:$0xff pattern:$0x75316420]
      %490 = vrot.lane.b32.xlu0 %v489, 21
      %v491 = vpop.permute.xlu0 %490
      %vm493 = vcmask 429352
      %494 = vst.msk [vmem:[#allocation2] sm:$0xf] %vm493, %v491
      %495 = vst [vmem:[#allocation1] ss:$2 sm:$0xff] %v479
      %v496 = vld.sshfl [vmem:[#allocation1] sm:$0xff pattern:$0x75316420]
      %497 = vrot.lane.b32.xlu0 %v496, 23
      %v498 = vpop.permute.xlu0 %497
      %vm500 = vcmask 576952
      %501 = vst.msk [vmem:[#allocation2] sm:$0xf] %vm500, %v498
      %502 = vst [vmem:[#allocation1] ss:$2 sm:$0xff] %v479
      %v503 = vld.sshfl [vmem:[#allocation1] sm:$0xff pattern:$0x75316420]
      %504 = vrot.lane.b32.xlu0 %v503, 25
      %v505 = vpop.permute.xlu0 %504
      %vm507 = vcmask 724552
      %508 = vst.msk [vmem:[#allocation2] sm:$0xf] %vm507, %v505
      %509 = vst [vmem:[#allocation1] ss:$2 sm:$0xff] %v479
      %v510 = vld.sshfl [vmem:[#allocation1] sm:$0xff pattern:$0x75316420]
      %511 = vrot.lane.b32.xlu0 %v510, 27
      %v512 = vpop.permute.xlu0 %511
      %vm514 = vcmask 872152
      %515 = vst.msk [vmem:[#allocation2] sm:$0xf] %vm514, %v512
      %516 = vst [vmem:[#allocation1] ss:$2 sm:$0xff] %v479
      %v517 = vld.sshfl [vmem:[#allocation1] sm:$0xff pattern:$0x75316420]
      %518 = vrot.lane.b32.xlu0 %v517, 29
      %v519 = vpop.permute.xlu0 %518
      %vm521 = vcmask 1019752
      %522 = vst.msk [vmem:[#allocation2] sm:$0xf] %vm521, %v519
      %523 = vst [vmem:[#allocation1] ss:$2 sm:$0xff] %v479
      %v524 = vld.sshfl [vmem:[#allocation1] sm:$0xff pattern:$0x75316420]
      %525 = vrot.lane.b32.xlu0 %v524, 31
      %v526 = vpop.permute.xlu0 %525
      %vm528 = vcmask 1044472
      %529 = vst.msk [vmem:[#allocation2] sm:$0xf] %vm528, %v526
      %vm530 = vcmask 117760
      %531 = vst.msk [vmem:[#allocation2 + $0x8] sm:$0xf] %vm530, %v526
      %532 = vst [vmem:[#allocation1] ss:$2 sm:$0xff] %v479
      %v533 = vld.sshfl [vmem:[#allocation1] sm:$0xff pattern:$0x75316420]
      %534 = vrot.lane.b32.xlu0 %v533, 33
      %v535 = vpop.permute.xlu0 %534
      %vm537 = vcmask 265352
      %538 = vst.msk [vmem:[#allocation2 + $0x8] sm:$0xf] %vm537, %v535
      %539 = vst [vmem:[#allocation1] ss:$2 sm:$0xff] %v479
      %v540 = vld.sshfl [vmem:[#allocation1 + $0x8] sm:$0xff pattern:$0x75316420]
      %541 = vrot.lane.b32.xlu0 %v540, 35
      %v542 = vpop.permute.xlu0 %541
      %vm544 = vcmask 412952
      %545 = vst.msk [vmem:[#allocation2 + $0x8] sm:$0xf] %vm544, %v542
      %546 = vst [vmem:[#allocation1] ss:$2 sm:$0xff] %v479
      %v547 = vld.sshfl [vmem:[#allocation1 + $0x8] sm:$0xff pattern:$0x75316420]
      %548 = vrot.lane.b32.xlu0 %v547, 37
      %v549 = vpop.permute.xlu0 %548
      %vm551 = vcmask 560552
      %552 = vst.msk [vmem:[#allocation2 + $0x8] sm:$0xf] %vm551, %v549
      %553 = vst [vmem:[#allocation1] ss:$2 sm:$0xff] %v479
      %v554 = vld.sshfl [vmem:[#allocation1 + $0x8] sm:$0xff pattern:$0x75316420]
      %555 = vrot.lane.b32.xlu0 %v554, 39
      %v556 = vpop.permute.xlu0 %555
      %vm558 = vcmask 708152
      %559 = vst.msk [vmem:[#allocation2 + $0x8] sm:$0xf] %vm558, %v556
      %560 = vst [vmem:[#allocation1] ss:$2 sm:$0xff] %v479
      %v561 = vld.sshfl [vmem:[#allocation1 + $0x8] sm:$0xff pattern:$0x75316420]
      %562 = vrot.lane.b32.xlu0 %v561, 41
      %v563 = vpop.permute.xlu0 %562
      %vm565 = vcmask 855752
      %566 = vst.msk [vmem:[#allocation2 + $0x8] sm:$0xf] %vm565, %v563
      %567 = vst [vmem:[#allocation1] ss:$2 sm:$0xff] %v479
      %v568 = vld.sshfl [vmem:[#allocation1 + $0x8] sm:$0xff pattern:$0x75316420]
      %569 = vrot.lane.b32.xlu0 %v568, 43
      %v570 = vpop.permute.xlu0 %569
      %vm572 = vcmask 1003352
      %573 = vst.msk [vmem:[#allocation2 + $0x8] sm:$0xf] %vm572, %v570
      %574 = vst [vmem:[#allocation1] ss:$2 sm:$0xff] %v479
      %v575 = vld.sshfl [vmem:[#allocation1 + $0x8] sm:$0xff pattern:$0x75316420]
      %576 = vrot.lane.b32.xlu0 %v575, 45
      %v577 = vpop.permute.xlu0 %576
      %vm579 = vcmask 1044456
      %580 = vst.msk [vmem:[#allocation2 + $0x8] sm:$0xf] %vm579, %v577
      %vm581 = vcmask 101376
      %582 = vst.msk [vmem:[#allocation2 + $0x10] sm:$0xf] %vm581, %v577
      %583 = vst [vmem:[#allocation1] ss:$2 sm:$0xff] %v479
      %v584 = vld.sshfl [vmem:[#allocation1 + $0x8] sm:$0xff pattern:$0x75316420]
      %585 = vrot.lane.b32.xlu0 %v584, 47
      %v586 = vpop.permute.xlu0 %585
      %vm588 = vcmask 248952
      %589 = vst.msk [vmem:[#allocation2 + $0x10] sm:$0xf] %vm588, %v586
      %590 = vst [vmem:[#allocation1] ss:$2 sm:$0xff] %v479
      %v591 = vld.sshfl [vmem:[#allocation1 + $0x8] sm:$0xff pattern:$0x75316420]
      %592 = vrot.lane.b32.xlu0 %v591, 49
      %v593 = vpop.permute.xlu0 %592
      %vm595 = vcmask 396552
      %596 = vst.msk [vmem:[#allocation2 + $0x10] sm:$0xf] %vm595, %v593
      %v597 = vld [vmem:[%s458] sm:$0x3]
      %v598 = vld [vmem:[%s2] sm:$0xff]
      %v599 = vld [vmem:[%s2 + $0x8] sm:$0xf]
      %v600 = vld [vmem:[%s2 + $0xc] sm:$0xff]
      %v601 = vld [vmem:[%s2 + $0x14] sm:$0xf]
      %v602 = vld [vmem:[%s2 + $0x18] sm:$0xff]
      %v603 = vld [vmem:[%s2 + $0x20] sm:$0xf]
      %v604 = vld [vmem:[%s2 + $0x24] sm:$0xff]
      %v605 = vld [vmem:[%s2 + $0x2c] sm:$0xf]
      %v606 = vld [vmem:[%s2 + $0x30] sm:$0xff]
      %v607 = vld [vmem:[%s2 + $0x38] sm:$0xf]
      %v608 = vld [vmem:[%s2 + $0x3c] sm:$0xff]
      %v609 = vld [vmem:[%s2 + $0x44] sm:$0xf]
      %v610 = vld [vmem:[%s2 + $0x48] sm:$0xff]
      %v611 = vld [vmem:[%s2 + $0x50] sm:$0xf]
      %v612 = vld [vmem:[%s2 + $0x54] sm:$0xff]
      %v613 = vld [vmem:[%s2 + $0x5c] sm:$0xf]
      %v630 = vunpack.c.l.b16 %v598
      %v631 = vunpack.c.h.b16 %v598
      %v632 = vunpack.c.l.b16 %v599
      %v633 = vunpack.c.l.b16 %v600
      %v634 = vunpack.c.h.b16 %v600
      %v635 = vunpack.c.l.b16 %v601
      %v636 = vunpack.c.l.b16 %v602
      %v637 = vunpack.c.h.b16 %v602
      %v638 = vunpack.c.l.b16 %v603
      %v639 = vunpack.c.l.b16 %v604
      %v640 = vunpack.c.h.b16 %v604
      %v641 = vunpack.c.l.b16 %v605
      %v642 = vunpack.c.l.b16 %v606
      %v643 = vunpack.c.h.b16 %v606
      %v644 = vunpack.c.l.b16 %v607
      %v645 = vunpack.c.l.b16 %v608
      %v646 = vunpack.c.h.b16 %v608
      %v647 = vunpack.c.l.b16 %v609
      %v648 = vunpack.c.l.b16 %v610
      %v649 = vunpack.c.h.b16 %v610
      %v650 = vunpack.c.l.b16 %v611
      %v651 = vunpack.c.l.b16 %v612
      %v652 = vunpack.c.h.b16 %v612
      %v653 = vunpack.c.l.b16 %v613
      %v654 = vpack.c.b16 %v633, %v630
      %v655 = vpack.c.b16 %v634, %v631
      %v656 = vpack.c.b16 %v635, %v632
      %v657 = vpack.c.b16 %v639, %v636
      %v658 = vpack.c.b16 %v640, %v637
      %v659 = vpack.c.b16 %v641, %v638
      %v660 = vpack.c.b16 %v645, %v642
      %v661 = vpack.c.b16 %v646, %v643
      %v662 = vpack.c.b16 %v647, %v644
      %v663 = vpack.c.b16 %v651, %v648
      %v664 = vpack.c.b16 %v652, %v649
      %v665 = vpack.c.b16 %v653, %v650
      %vm678 = vcmask 523264
      %v680 = vsel %vm678, %v597, 0
      %682 = vmatpush.bf16.msra.mxu0 0
      %683 = vmatpush.bf16.msra.mxu0 0
      %684 = vmatpush.bf16.msra.mxu0 0
      %685 = vmatpush.bf16.msra.mxu0 0
      %686 = vmatpush.bf16.msra.mxu0 %v663
      %687 = vmatpush.bf16.msra.mxu0 %v660
      %688 = vmatpush.bf16.msra.mxu0 %v657
      %689 = vmatpush.bf16.msra.mxu0 %v654
      %690 = vmatmul.bf16.gmra.mxu0 %v680
      %v691 = vpop.f32.mrf.mxu0
      %v692 = vadd.f32 0.0, %v691
      %v693 = vpop.f32.mrf.mxu0
      %694 = vdwg.mxu0
      %695 = vmatpush.bf16.msra.mxu0 0
      %696 = vmatpush.bf16.msra.mxu0 0
      %697 = vmatpush.bf16.msra.mxu0 0
      %698 = vmatpush.bf16.msra.mxu0 0
      %699 = vmatpush.bf16.msra.mxu0 %v664
      %700 = vmatpush.bf16.msra.mxu0 %v661
      %701 = vmatpush.bf16.msra.mxu0 %v658
      %702 = vmatpush.bf16.msra.mxu0 %v655
      %703 = vmatmul.bf16.gmra.mxu0 %v680
      %v704 = vpop.f32.mrf.mxu0
      %v705 = vadd.f32 0.0, %v704
      %v706 = vpop.f32.mrf.mxu0
      %707 = vdwg.mxu0
      %708 = vmatpush.bf16.msra.mxu0 0
      %709 = vmatpush.bf16.msra.mxu0 0
      %710 = vmatpush.bf16.msra.mxu0 0
      %711 = vmatpush.bf16.msra.mxu0 0
      %712 = vmatpush.bf16.msra.mxu0 %v665
      %713 = vmatpush.bf16.msra.mxu0 %v662
      %714 = vmatpush.bf16.msra.mxu0 %v659
      %715 = vmatpush.bf16.msra.mxu0 %v656
      %716 = vmatmul.bf16.gmra.mxu0 %v680
      %v717 = vpop.f32.mrf.mxu0
      %v718 = vadd.f32 0.0, %v717
      %v719 = vpop.f32.mrf.mxu0
      %720 = vdwg.mxu0
      %v724 = vrot.slane %v692, 4
      %v725 = vrot.slane %v705, 4
      %v726 = vrot.slane %v718, 4
      %727 = vrot.lane.b32.xlu0 %v724, 19
      %v728 = vpop.permute.xlu0 %727
      %729 = vrot.lane.b32.xlu0 %v725, 19
      %v730 = vpop.permute.xlu0 %729
      %731 = vrot.lane.b32.xlu0 %v726, 19
      %v732 = vpop.permute.xlu0 %731
      %vm733 = vcmask 154624
      %v734 = vsel %vm733, %v728, %v730
      %v735 = vsel %vm733, %v730, %v732
      %vm739 = vcmask 1047708
      %740 = vst.msk [vmem:[#allocation2] sm:$0xf0] %vm739, %v728
      %741 = vst [vmem:[#allocation2 + $0x8] sm:$0xf0] %v734
      %vm742 = vcmask 416772
      %743 = vst.msk [vmem:[#allocation2 + $0x10] sm:$0xf0] %vm742, %v735
      %v744 = vld [vmem:[#allocation2] sm:$0xff]
      %v745 = vld [vmem:[#allocation2 + $0x8] sm:$0xff]
      %v746 = vld [vmem:[#allocation2 + $0x10] sm:$0xff]
      %750 = vrot.lane.b32.xlu0 %v744, 127
      %v751 = vpop.permute.xlu0 %750
      %752 = vrot.lane.b32.xlu0 %v745, 127
      %v753 = vpop.permute.xlu0 %752
      %754 = vrot.lane.b32.xlu0 %v746, 127
      %v755 = vpop.permute.xlu0 %754
      %vm756 = vcmask 1039360
      %v757 = vsel %vm756, %v751, %v753
      %v758 = vsel %vm756, %v753, %v755
      %762 = vrot.lane.b32.xlu0 %v744, 126
      %v763 = vpop.permute.xlu0 %762
      %764 = vrot.lane.b32.xlu0 %v745, 126
      %v765 = vpop.permute.xlu0 %764
      %766 = vrot.lane.b32.xlu0 %v746, 126
      %v767 = vpop.permute.xlu0 %766
      %vm768 = vcmask 1031168
      %v769 = vsel %vm768, %v763, %v765
      %v770 = vsel %vm768, %v765, %v767
      %774 = vrot.lane.b32.xlu0 %v744, 110
      %v775 = vpop.permute.xlu0 %774
      %776 = vrot.lane.b32.xlu0 %v745, 110
      %v777 = vpop.permute.xlu0 %776
      %778 = vrot.lane.b32.xlu0 %v746, 110
      %v779 = vpop.permute.xlu0 %778
      %vm780 = vcmask 900096
      %v781 = vsel %vm780, %v775, %v777
      %v782 = vsel %vm780, %v777, %v779
      %786 = vrot.lane.b32.xlu0 %v744, 109
      %v787 = vpop.permute.xlu0 %786
      %788 = vrot.lane.b32.xlu0 %v745, 109
      %v789 = vpop.permute.xlu0 %788
      %790 = vrot.lane.b32.xlu0 %v746, 109
      %v791 = vpop.permute.xlu0 %790
      %vm792 = vcmask 891904
      %v793 = vsel %vm792, %v787, %v789
      %v794 = vsel %vm792, %v789, %v791
      %798 = vrot.lane.b32.xlu0 %v744, 108
      %v799 = vpop.permute.xlu0 %798
      %800 = vrot.lane.b32.xlu0 %v745, 108
      %v801 = vpop.permute.xlu0 %800
      %802 = vrot.lane.b32.xlu0 %v746, 108
      %v803 = vpop.permute.xlu0 %802
      %vm804 = vcmask 883712
      %v805 = vsel %vm804, %v799, %v801
      %v806 = vsel %vm804, %v801, %v803
      %810 = vrot.lane.b32.xlu0 %v744, 92
      %v811 = vpop.permute.xlu0 %810
      %812 = vrot.lane.b32.xlu0 %v745, 92
      %v813 = vpop.permute.xlu0 %812
      %814 = vrot.lane.b32.xlu0 %v746, 92
      %v815 = vpop.permute.xlu0 %814
      %vm816 = vcmask 752640
      %v817 = vsel %vm816, %v811, %v813
      %v818 = vsel %vm816, %v813, %v815
      %822 = vrot.lane.b32.xlu0 %v744, 91
      %v823 = vpop.permute.xlu0 %822
      %824 = vrot.lane.b32.xlu0 %v745, 91
      %v825 = vpop.permute.xlu0 %824
      %826 = vrot.lane.b32.xlu0 %v746, 91
      %v827 = vpop.permute.xlu0 %826
      %vm828 = vcmask 744448
      %v829 = vsel %vm828, %v823, %v825
      %v830 = vsel %vm828, %v825, %v827
      %834 = vrot.lane.b32.xlu0 %v744, 90
      %v835 = vpop.permute.xlu0 %834
      %836 = vrot.lane.b32.xlu0 %v745, 90
      %v837 = vpop.permute.xlu0 %836
      %838 = vrot.lane.b32.xlu0 %v746, 90
      %v839 = vpop.permute.xlu0 %838
      %vm840 = vcmask 736256
      %v841 = vsel %vm840, %v835, %v837
      %v842 = vsel %vm840, %v837, %v839
      %v846 = vld [vmem:[%s4] sm:$0xf]
      %v847 = vpack.c.bf16 %v757, %v744
      %v848 = vpack.c.bf16 %v758, %v745
      %v849 = vpack.c.bf16 %v755, %v746
      %v850 = vpack.c.bf16 %v781, %v769
      %v851 = vpack.c.bf16 %v782, %v770
      %v852 = vpack.c.bf16 %v779, %v767
      %v853 = vpack.c.bf16 %v805, %v793
      %v854 = vpack.c.bf16 %v806, %v794
      %v855 = vpack.c.bf16 %v803, %v791
      %v856 = vpack.c.bf16 %v829, %v817
      %v857 = vpack.c.bf16 %v830, %v818
      %v858 = vpack.c.bf16 %v827, %v815
      %v859 = vpack.c.bf16 %v841, %v841
      %v860 = vpack.c.bf16 %v842, %v842
      %v861 = vpack.c.bf16 %v839, %v839
      %vm862 = vcmask 588800
      %v864 = vsel %vm862, %v846, 0
      %vm866 = vcmask 1043456
      %v868 = vsel %vm866, %v859, 0
      %v871 = vsel %vm866, %v860, 0
      %v874 = vsel %vm866, %v861, 0
      %876 = vmatpush.bf16.msra.mxu0 0
      %877 = vmatpush.bf16.msra.mxu0 0
      %878 = vmatpush.bf16.msra.mxu0 0
      %879 = vmatpush.bf16.msra.mxu0 %v868
      %880 = vmatpush.bf16.msra.mxu0 %v856
      %881 = vmatpush.bf16.msra.mxu0 %v853
      %882 = vmatpush.bf16.msra.mxu0 %v850
      %883 = vmatpush.bf16.msra.mxu0 %v847
      %884 = vmatmul.bf16.gmra.mxu0 %v864
      %v885 = vpop.f32.mrf.mxu0
      %v886 = vadd.f32 0.0, %v885
      %v887 = vpop.f32.mrf.mxu0
      %888 = vdwg.mxu0
      %889 = vmatpush.bf16.msra.mxu0 0
      %890 = vmatpush.bf16.msra.mxu0 0
      %891 = vmatpush.bf16.msra.mxu0 0
      %892 = vmatpush.bf16.msra.mxu0 %v871
      %893 = vmatpush.bf16.msra.mxu0 %v857
      %894 = vmatpush.bf16.msra.mxu0 %v854
      %895 = vmatpush.bf16.msra.mxu0 %v851
      %896 = vmatpush.bf16.msra.mxu0 %v848
      %897 = vmatmul.bf16.gmra.mxu0 %v864
      %v898 = vpop.f32.mrf.mxu0
      %v899 = vadd.f32 0.0, %v898
      %v900 = vpop.f32.mrf.mxu0
      %901 = vdwg.mxu0
      %902 = vmatpush.bf16.msra.mxu0 0
      %903 = vmatpush.bf16.msra.mxu0 0
      %904 = vmatpush.bf16.msra.mxu0 0
      %905 = vmatpush.bf16.msra.mxu0 %v874
      %906 = vmatpush.bf16.msra.mxu0 %v858
      %907 = vmatpush.bf16.msra.mxu0 %v855
      %908 = vmatpush.bf16.msra.mxu0 %v852
      %909 = vmatpush.bf16.msra.mxu0 %v849
      %910 = vmatmul.bf16.gmra.mxu0 %v864
      %v911 = vpop.f32.mrf.mxu0
      %v912 = vadd.f32 0.0, %v911
      %v913 = vpop.f32.mrf.mxu0
      %914 = vdwg.mxu0
      %v916 = vperm.slane %v473, 0
      %v917 = vperm.slane %v473, 1
      %v918 = vperm.slane %v473, 2
      %v922 = vmul.f32 %v886, %v916
      %v923 = vmul.f32 %v899, %v917
      %v924 = vmul.f32 %v912, %v918
      %v925 = vld [vmem:[%s5] sm:$0xff]
      %v926 = vld [vmem:[%s6] sm:$0xff]
      %v927 = vadd.f32 %v922, %v923
      %vm928 = vcmask 261120
      %v929 = vsel %vm928, %v924, 0.0
      %v930 = vadd.f32 %v927, %v929
      %931 = vadd.xlane.f32.xlu0 %v930
      %v932 = vpop.xlane.xlu0 %931
      %v933 = vrot.slane %v932, 4
      %v934 = vadd.f32 %v932, %v933
      %v935 = vrot.slane %v934, 2
      %v936 = vadd.f32 %v934, %v935
      %v937 = vrot.slane %v936, 1
      %v938 = vadd.f32 %v936, %v937
      %s939 = vtos %v938
      %v940 = vrcp.pop 1024.0
      %v941 = vmul.f32 1024.0, %v940
      %v942 = vsub.f32 1.0, %v941
      %v943 = vmul.f32 %v940, %v942
      %v944 = vadd.f32 %v940, %v943
      %vm945 = vweird.f32 %v940
      %v946 = vsel %vm945, %v940, %v944
      %s947 = vtos %v946
      %s948 = smul.f32 %s939, %s947
      %v949 = vmul.f32 %v922, %v922
      %v950 = vmul.f32 %v923, %v923
      %v951 = vmul.f32 %v924, %v924
      %v952 = vadd.f32 %v949, %v950
      %v953 = vsel %vm928, %v951, 0.0
      %v954 = vadd.f32 %v952, %v953
      %955 = vadd.xlane.f32.xlu0 %v954
      %v956 = vpop.xlane.xlu0 %955
      %v957 = vrot.slane %v956, 4
      %v958 = vadd.f32 %v956, %v957
      %v959 = vrot.slane %v958, 2
      %v960 = vadd.f32 %v958, %v959
      %v961 = vrot.slane %v960, 1
      %v962 = vadd.f32 %v960, %v961
      %s963 = vtos %v962
      %v964 = vrcp.pop 1024.0
      %v965 = vmul.f32 1024.0, %v964
      %v966 = vsub.f32 1.0, %v965
      %v967 = vmul.f32 %v964, %v966
      %v968 = vadd.f32 %v964, %v967
      %vm969 = vweird.f32 %v964
      %v970 = vsel %vm969, %v964, %v968
      %s971 = vtos %v970
      %s972 = smul.f32 %s963, %s971
      %s973 = smul.f32 %s948, %s948
      %s974 = ssub.f32 %s972, %s973
      %s975 = smax.f32 %s974, 0.0
      %s976 = sadd.f32 %s975, 1e-05
      %v977 = vstv %s976
      %v978 = vrsqrt.pop %v977
      %v979 = vmul.f32 %v978, %v977
      %v980 = vmul.f32 %v979, %v978
      %v981 = vmul.f32 0.5, %v980
      %v982 = vsub.f32 1.5, %v981
      %v983 = vmul.f32 %v978, %v982
      %vm984 = vweird.f32 %v977
      %vm985 = vweird.f32 %v978
      %vm986 = vmor %vm984, %vm985
      %v987 = vsel %vm986, %v978, %v983
      %s988 = vtos %v987
      %v989 = vstv %s988
      %v990 = vmul.f32 %v925, %v989
      %992 = vset.pattern.permute.xlu0 0
      %993 = vperm.xlu0 %992, %v990
      %v994 = vpop.permute.xlu0 %993
      %v996 = vmul.f32 %v922, %v994
      %v997 = vmul.f32 %v923, %v994
      %v998 = vmul.f32 %v924, %v994
      %v999 = vstv %s948
      %v1000 = vmul.f32 %v999, %v990
      %v1001 = vsub.f32 %v926, %v1000
      %1003 = vset.pattern.permute.xlu0 0
      %1004 = vperm.xlu0 %1003, %v1001
      %v1005 = vpop.permute.xlu0 %1004
      %v1007 = vadd.f32 %v996, %v1005
      %v1008 = vadd.f32 %v997, %v1005
      %v1009 = vadd.f32 %v998, %v1005
      %v1010 = vmul.f32 %v1007, 0.5
      %v1011 = vmul.f32 %v1008, 0.5
      %v1012 = vmul.f32 %v1009, 0.5
      %v1013 = vmul.f32 %v1007, 0.70710677
      %v1014 = vmul.f32 %v1008, 0.70710677
      %v1015 = vmul.f32 %v1009, 0.70710677
      %v1016 = vmul.f32 %v1013, %v1013
      %v1017 = vmin.f32 16.0, %v1016
      %v1018 = vmul.f32 %v1017, 2.1237322e-06
      %v1019 = vadd.f32 %v1018, 0.00028619796
      %v1020 = vmul.f32 %v1017, %v1019
      %v1021 = vadd.f32 %v1020, 0.0036580483
      %v1022 = vmul.f32 %v1017, %v1021
      %v1023 = vadd.f32 %v1022, 0.05243302
      %v1024 = vmul.f32 %v1017, %v1023
      %v1025 = vadd.f32 %v1024, 0.18741608
      %v1026 = vmul.f32 %v1017, %v1025
      %v1027 = vadd.f32 %v1026, 1.1283791
      %v1028 = vmul.f32 %v1013, %v1027
      %v1029 = vmul.f32 %v1017, 3.8918573e-05
      %v1030 = vadd.f32 %v1029, 0.001143296
      %v1031 = vmul.f32 %v1017, %v1030
      %v1032 = vadd.f32 %v1031, 0.014752088
      %v1033 = vmul.f32 %v1017, %v1032
      %v1034 = vadd.f32 %v1033, 0.112945676
      %v1035 = vmul.f32 %v1017, %v1034
      %v1036 = vadd.f32 %v1035, 0.4994258
      %v1037 = vmul.f32 %v1017, %v1036
      %v1038 = vadd.f32 %v1037, 1.0
      %v1039 = vrcp.pop %v1038
      %v1040 = vmul.f32 %v1038, %v1039
      %v1041 = vsub.f32 1.0, %v1040
      %v1042 = vmul.f32 %v1039, %v1041
      %v1043 = vadd.f32 %v1039, %v1042
      %vm1044 = vweird.f32 %v1038
      %vm1045 = vweird.f32 %v1039
      %vm1046 = vmor %vm1044, %vm1045
      %v1047 = vsel %vm1046, %v1039, %v1043
      %v1048 = vand.u32 2147483647, %v1038
      %vm1049 = vcmp.eq.f32.partialorder %v1048, 8.507059e+37
      %v1050 = vand.u32 %v1038, 2147483648
      %v1051 = vor.u32 1.1754944e-38, %v1050
      %v1052 = vsel %vm1049, %v1051, %v1047
      %v1053 = vmul.f32 %v1028, %v1052
      %v1054 = vmin.f32 %v1053, 1.0
      %v1055 = vmax.f32 %v1054, -1.0
      %v1056 = vmul.f32 %v1014, %v1014
      %v1057 = vmin.f32 16.0, %v1056
      %v1058 = vmul.f32 %v1057, 2.1237322e-06
      %v1059 = vadd.f32 %v1058, 0.00028619796
      %v1060 = vmul.f32 %v1057, %v1059
      %v1061 = vadd.f32 %v1060, 0.0036580483
      %v1062 = vmul.f32 %v1057, %v1061
      %v1063 = vadd.f32 %v1062, 0.05243302
      %v1064 = vmul.f32 %v1057, %v1063
      %v1065 = vadd.f32 %v1064, 0.18741608
      %v1066 = vmul.f32 %v1057, %v1065
      %v1067 = vadd.f32 %v1066, 1.1283791
      %v1068 = vmul.f32 %v1014, %v1067
      %v1069 = vmul.f32 %v1057, 3.8918573e-05
      %v1070 = vadd.f32 %v1069, 0.001143296
      %v1071 = vmul.f32 %v1057, %v1070
      %v1072 = vadd.f32 %v1071, 0.014752088
      %v1073 = vmul.f32 %v1057, %v1072
      %v1074 = vadd.f32 %v1073, 0.112945676
      %v1075 = vmul.f32 %v1057, %v1074
      %v1076 = vadd.f32 %v1075, 0.4994258
      %v1077 = vmul.f32 %v1057, %v1076
      %v1078 = vadd.f32 %v1077, 1.0
      %v1079 = vrcp.pop %v1078
      %v1080 = vmul.f32 %v1078, %v1079
      %v1081 = vsub.f32 1.0, %v1080
      %v1082 = vmul.f32 %v1079, %v1081
      %v1083 = vadd.f32 %v1079, %v1082
      %vm1084 = vweird.f32 %v1078
      %vm1085 = vweird.f32 %v1079
      %vm1086 = vmor %vm1084, %vm1085
      %v1087 = vsel %vm1086, %v1079, %v1083
      %v1088 = vand.u32 2147483647, %v1078
      %vm1089 = vcmp.eq.f32.partialorder %v1088, 8.507059e+37
      %v1090 = vand.u32 %v1078, 2147483648
      %v1091 = vor.u32 1.1754944e-38, %v1090
      %v1092 = vsel %vm1089, %v1091, %v1087
      %v1093 = vmul.f32 %v1068, %v1092
      %v1094 = vmin.f32 %v1093, 1.0
      %v1095 = vmax.f32 %v1094, -1.0
      %v1096 = vmul.f32 %v1015, %v1015
      %v1097 = vmin.f32 16.0, %v1096
      %v1098 = vmul.f32 %v1097, 2.1237322e-06
      %v1099 = vadd.f32 %v1098, 0.00028619796
      %v1100 = vmul.f32 %v1097, %v1099
      %v1101 = vadd.f32 %v1100, 0.0036580483
      %v1102 = vmul.f32 %v1097, %v1101
      %v1103 = vadd.f32 %v1102, 0.05243302
      %v1104 = vmul.f32 %v1097, %v1103
      %v1105 = vadd.f32 %v1104, 0.18741608
      %v1106 = vmul.f32 %v1097, %v1105
      %v1107 = vadd.f32 %v1106, 1.1283791
      %v1108 = vmul.f32 %v1015, %v1107
      %v1109 = vmul.f32 %v1097, 3.8918573e-05
      %v1110 = vadd.f32 %v1109, 0.001143296
      %v1111 = vmul.f32 %v1097, %v1110
      %v1112 = vadd.f32 %v1111, 0.014752088
      %v1113 = vmul.f32 %v1097, %v1112
      %v1114 = vadd.f32 %v1113, 0.112945676
      %v1115 = vmul.f32 %v1097, %v1114
      %v1116 = vadd.f32 %v1115, 0.4994258
      %v1117 = vmul.f32 %v1097, %v1116
      %v1118 = vadd.f32 %v1117, 1.0
      %v1119 = vrcp.pop %v1118
      %v1120 = vmul.f32 %v1118, %v1119
      %v1121 = vsub.f32 1.0, %v1120
      %v1122 = vmul.f32 %v1119, %v1121
      %v1123 = vadd.f32 %v1119, %v1122
      %vm1124 = vweird.f32 %v1118
      %vm1125 = vweird.f32 %v1119
      %vm1126 = vmor %vm1124, %vm1125
      %v1127 = vsel %vm1126, %v1119, %v1123
      %v1128 = vand.u32 2147483647, %v1118
      %vm1129 = vcmp.eq.f32.partialorder %v1128, 8.507059e+37
      %v1130 = vand.u32 %v1118, 2147483648
      %v1131 = vor.u32 1.1754944e-38, %v1130
      %v1132 = vsel %vm1129, %v1131, %v1127
      %v1133 = vmul.f32 %v1108, %v1132
      %v1134 = vmin.f32 %v1133, 1.0
      %v1135 = vmax.f32 %v1134, -1.0
      %v1136 = vadd.f32 %v1055, 1.0
      %v1137 = vadd.f32 %v1095, 1.0
      %v1138 = vadd.f32 %v1135, 1.0
      %v1139 = vmul.f32 %v1010, %v1136
      %v1140 = vmul.f32 %v1011, %v1137
      %v1141 = vmul.f32 %v1012, %v1138
      %v1142 = vmul.f32 %v1139, %v916
      %v1143 = vmul.f32 %v1140, %v917
      %v1144 = vmul.f32 %v1141, %v918
      %1148 = vrot.lane.b32.xlu0 %v1142, 19
      %v1149 = vpop.permute.xlu0 %1148
      %1150 = vrot.lane.b32.xlu0 %v1143, 19
      %v1151 = vpop.permute.xlu0 %1150
      %1152 = vrot.lane.b32.xlu0 %v1144, 19
      %v1153 = vpop.permute.xlu0 %1152
      %v1154 = vsel %vm733, %v1149, %v1151
      %v1155 = vsel %vm733, %v1151, %v1153
      %vm1159 = vcmask 1047704
      %1160 = vst.msk [vmem:[#allocation2] sm:$0xff] %vm1159, %v1149
      %1161 = vst [vmem:[#allocation2 + $0x8] sm:$0xff] %v1154
      %vm1162 = vcmask 416768
      %1163 = vst.msk [vmem:[#allocation2 + $0x10] sm:$0xff] %vm1162, %v1155
      %v1164 = vld [vmem:[#allocation2] sm:$0xff]
      %v1165 = vld [vmem:[#allocation2 + $0x8] sm:$0xff]
      %v1166 = vld [vmem:[#allocation2 + $0x10] sm:$0xff]
      %1170 = vrot.lane.b32.xlu0 %v1164, 127
      %v1171 = vpop.permute.xlu0 %1170
      %1172 = vrot.lane.b32.xlu0 %v1165, 127
      %v1173 = vpop.permute.xlu0 %1172
      %1174 = vrot.lane.b32.xlu0 %v1166, 127
      %v1175 = vpop.permute.xlu0 %1174
      %v1176 = vsel %vm756, %v1171, %v1173
      %v1177 = vsel %vm756, %v1173, %v1175
      %1181 = vrot.lane.b32.xlu0 %v1164, 126
      %v1182 = vpop.permute.xlu0 %1181
      %1183 = vrot.lane.b32.xlu0 %v1165, 126
      %v1184 = vpop.permute.xlu0 %1183
      %1185 = vrot.lane.b32.xlu0 %v1166, 126
      %v1186 = vpop.permute.xlu0 %1185
      %v1187 = vsel %vm768, %v1182, %v1184
      %v1188 = vsel %vm768, %v1184, %v1186
      %1192 = vrot.lane.b32.xlu0 %v1164, 110
      %v1193 = vpop.permute.xlu0 %1192
      %1194 = vrot.lane.b32.xlu0 %v1165, 110
      %v1195 = vpop.permute.xlu0 %1194
      %1196 = vrot.lane.b32.xlu0 %v1166, 110
      %v1197 = vpop.permute.xlu0 %1196
      %v1198 = vsel %vm780, %v1193, %v1195
      %v1199 = vsel %vm780, %v1195, %v1197
      %1203 = vrot.lane.b32.xlu0 %v1164, 109
      %v1204 = vpop.permute.xlu0 %1203
      %1205 = vrot.lane.b32.xlu0 %v1165, 109
      %v1206 = vpop.permute.xlu0 %1205
      %1207 = vrot.lane.b32.xlu0 %v1166, 109
      %v1208 = vpop.permute.xlu0 %1207
      %v1209 = vsel %vm792, %v1204, %v1206
      %v1210 = vsel %vm792, %v1206, %v1208
      %1214 = vrot.lane.b32.xlu0 %v1164, 108
      %v1215 = vpop.permute.xlu0 %1214
      %1216 = vrot.lane.b32.xlu0 %v1165, 108
      %v1217 = vpop.permute.xlu0 %1216
      %1218 = vrot.lane.b32.xlu0 %v1166, 108
      %v1219 = vpop.permute.xlu0 %1218
      %v1220 = vsel %vm804, %v1215, %v1217
      %v1221 = vsel %vm804, %v1217, %v1219
      %1225 = vrot.lane.b32.xlu0 %v1164, 92
      %v1226 = vpop.permute.xlu0 %1225
      %1227 = vrot.lane.b32.xlu0 %v1165, 92
      %v1228 = vpop.permute.xlu0 %1227
      %1229 = vrot.lane.b32.xlu0 %v1166, 92
      %v1230 = vpop.permute.xlu0 %1229
      %v1231 = vsel %vm816, %v1226, %v1228
      %v1232 = vsel %vm816, %v1228, %v1230
      %1236 = vrot.lane.b32.xlu0 %v1164, 91
      %v1237 = vpop.permute.xlu0 %1236
      %1238 = vrot.lane.b32.xlu0 %v1165, 91
      %v1239 = vpop.permute.xlu0 %1238
      %1240 = vrot.lane.b32.xlu0 %v1166, 91
      %v1241 = vpop.permute.xlu0 %1240
      %v1242 = vsel %vm828, %v1237, %v1239
      %v1243 = vsel %vm828, %v1239, %v1241
      %1247 = vrot.lane.b32.xlu0 %v1164, 90
      %v1248 = vpop.permute.xlu0 %1247
      %1249 = vrot.lane.b32.xlu0 %v1165, 90
      %v1250 = vpop.permute.xlu0 %1249
      %1251 = vrot.lane.b32.xlu0 %v1166, 90
      %v1252 = vpop.permute.xlu0 %1251
      %v1253 = vsel %vm840, %v1248, %v1250
      %v1254 = vsel %vm840, %v1250, %v1252
      %v1258 = vld [vmem:[%s7] sm:$0xf]
      %v1259 = vpack.c.bf16 %v1176, %v1164
      %v1260 = vpack.c.bf16 %v1177, %v1165
      %v1261 = vpack.c.bf16 %v1175, %v1166
      %v1262 = vpack.c.bf16 %v1198, %v1187
      %v1263 = vpack.c.bf16 %v1199, %v1188
      %v1264 = vpack.c.bf16 %v1197, %v1186
      %v1265 = vpack.c.bf16 %v1220, %v1209
      %v1266 = vpack.c.bf16 %v1221, %v1210
      %v1267 = vpack.c.bf16 %v1219, %v1208
      %v1268 = vpack.c.bf16 %v1242, %v1231
      %v1269 = vpack.c.bf16 %v1243, %v1232
      %v1270 = vpack.c.bf16 %v1241, %v1230
      %v1271 = vpack.c.bf16 %v1253, %v1253
      %v1272 = vpack.c.bf16 %v1254, %v1254
      %v1273 = vpack.c.bf16 %v1252, %v1252
      %v1275 = vsel %vm862, %v1258, 0
      %v1278 = vsel %vm866, %v1271, 0
      %v1281 = vsel %vm866, %v1272, 0
      %v1284 = vsel %vm866, %v1273, 0
      %1286 = vmatpush.bf16.msra.mxu0 0
      %1287 = vmatpush.bf16.msra.mxu0 0
      %1288 = vmatpush.bf16.msra.mxu0 0
      %1289 = vmatpush.bf16.msra.mxu0 %v1278
      %1290 = vmatpush.bf16.msra.mxu0 %v1268
      %1291 = vmatpush.bf16.msra.mxu0 %v1265
      %1292 = vmatpush.bf16.msra.mxu0 %v1262
      %1293 = vmatpush.bf16.msra.mxu0 %v1259
      %1294 = vmatmul.bf16.gmra.mxu0 %v1275
      %v1295 = vpop.f32.mrf.mxu0
      %v1296 = vadd.f32 0.0, %v1295
      %v1297 = vpop.f32.mrf.mxu0
      %1298 = vdwg.mxu0
      %1299 = vmatpush.bf16.msra.mxu0 0
      %1300 = vmatpush.bf16.msra.mxu0 0
      %1301 = vmatpush.bf16.msra.mxu0 0
      %1302 = vmatpush.bf16.msra.mxu0 %v1281
      %1303 = vmatpush.bf16.msra.mxu0 %v1269
      %1304 = vmatpush.bf16.msra.mxu0 %v1266
      %1305 = vmatpush.bf16.msra.mxu0 %v1263
      %1306 = vmatpush.bf16.msra.mxu0 %v1260
      %1307 = vmatmul.bf16.gmra.mxu0 %v1275
      %v1308 = vpop.f32.mrf.mxu0
      %v1309 = vadd.f32 0.0, %v1308
      %v1310 = vpop.f32.mrf.mxu0
      %1311 = vdwg.mxu0
      %1312 = vmatpush.bf16.msra.mxu0 0
      %1313 = vmatpush.bf16.msra.mxu0 0
      %1314 = vmatpush.bf16.msra.mxu0 0
      %1315 = vmatpush.bf16.msra.mxu0 %v1284
      %1316 = vmatpush.bf16.msra.mxu0 %v1270
      %1317 = vmatpush.bf16.msra.mxu0 %v1267
      %1318 = vmatpush.bf16.msra.mxu0 %v1264
      %1319 = vmatpush.bf16.msra.mxu0 %v1261
      %1320 = vmatmul.bf16.gmra.mxu0 %v1275
      %v1321 = vpop.f32.mrf.mxu0
      %v1322 = vadd.f32 0.0, %v1321
      %v1323 = vpop.f32.mrf.mxu0
      %1324 = vdwg.mxu0
      %v1325 = vmul.f32 %v1296, %v916
      %v1326 = vmul.f32 %v1309, %v917
      %v1327 = vmul.f32 %v1322, %v918
      %v1328 = vld [vmem:[%s8] sm:$0xff]
      %v1329 = vld [vmem:[%s9] sm:$0xff]
      %v1330 = vadd.f32 %v1325, %v1326
      %v1331 = vsel %vm928, %v1327, 0.0
      %v1332 = vadd.f32 %v1330, %v1331
      %1333 = vadd.xlane.f32.xlu0 %v1332
      %v1334 = vpop.xlane.xlu0 %1333
      %v1335 = vrot.slane %v1334, 4
      %v1336 = vadd.f32 %v1334, %v1335
      %v1337 = vrot.slane %v1336, 2
      %v1338 = vadd.f32 %v1336, %v1337
      %v1339 = vrot.slane %v1338, 1
      %v1340 = vadd.f32 %v1338, %v1339
      %s1341 = vtos %v1340
      %v1342 = vrcp.pop 1024.0
      %v1343 = vmul.f32 1024.0, %v1342
      %v1344 = vsub.f32 1.0, %v1343
      %v1345 = vmul.f32 %v1342, %v1344
      %v1346 = vadd.f32 %v1342, %v1345
      %vm1347 = vweird.f32 %v1342
      %v1348 = vsel %vm1347, %v1342, %v1346
      %s1349 = vtos %v1348
      %s1350 = smul.f32 %s1341, %s1349
      %v1351 = vmul.f32 %v1325, %v1325
      %v1352 = vmul.f32 %v1326, %v1326
      %v1353 = vmul.f32 %v1327, %v1327
      %v1354 = vadd.f32 %v1351, %v1352
      %v1355 = vsel %vm928, %v1353, 0.0
      %v1356 = vadd.f32 %v1354, %v1355
      %1357 = vadd.xlane.f32.xlu0 %v1356
      %v1358 = vpop.xlane.xlu0 %1357
      %v1359 = vrot.slane %v1358, 4
      %v1360 = vadd.f32 %v1358, %v1359
      %v1361 = vrot.slane %v1360, 2
      %v1362 = vadd.f32 %v1360, %v1361
      %v1363 = vrot.slane %v1362, 1
      %v1364 = vadd.f32 %v1362, %v1363
      %s1365 = vtos %v1364
      %v1366 = vrcp.pop 1024.0
      %v1367 = vmul.f32 1024.0, %v1366
      %v1368 = vsub.f32 1.0, %v1367
      %v1369 = vmul.f32 %v1366, %v1368
      %v1370 = vadd.f32 %v1366, %v1369
      %vm1371 = vweird.f32 %v1366
      %v1372 = vsel %vm1371, %v1366, %v1370
      %s1373 = vtos %v1372
      %s1374 = smul.f32 %s1365, %s1373
      %s1375 = smul.f32 %s1350, %s1350
      %s1376 = ssub.f32 %s1374, %s1375
      %s1377 = smax.f32 %s1376, 0.0
      %s1378 = sadd.f32 %s1377, 1e-05
      %v1379 = vstv %s1378
      %v1380 = vrsqrt.pop %v1379
      %v1381 = vmul.f32 %v1380, %v1379
      %v1382 = vmul.f32 %v1381, %v1380
      %v1383 = vmul.f32 0.5, %v1382
      %v1384 = vsub.f32 1.5, %v1383
      %v1385 = vmul.f32 %v1380, %v1384
      %vm1386 = vweird.f32 %v1379
      %vm1387 = vweird.f32 %v1380
      %vm1388 = vmor %vm1386, %vm1387
      %v1389 = vsel %vm1388, %v1380, %v1385
      %s1390 = vtos %v1389
      %v1391 = vstv %s1390
      %v1392 = vmul.f32 %v1328, %v1391
      %1394 = vset.pattern.permute.xlu0 0
      %1395 = vperm.xlu0 %1394, %v1392
      %v1396 = vpop.permute.xlu0 %1395
      %v1398 = vmul.f32 %v1325, %v1396
      %v1399 = vmul.f32 %v1326, %v1396
      %v1400 = vmul.f32 %v1327, %v1396
      %v1401 = vstv %s1350
      %v1402 = vmul.f32 %v1401, %v1392
      %v1403 = vsub.f32 %v1329, %v1402
      %1405 = vset.pattern.permute.xlu0 0
      %1406 = vperm.xlu0 %1405, %v1403
      %v1407 = vpop.permute.xlu0 %1406
      %v1409 = vadd.f32 %v1398, %v1407
      %v1410 = vadd.f32 %v1399, %v1407
      %v1411 = vadd.f32 %v1400, %v1407
      %v1412 = vld [vmem:[%s466] sm:$0x1]
      %v1413 = vxor.u32 %v1412, 2147483648
      %v1414 = vmul.f32 %v1413, 1.442695
      %v1415 = vpow.pop %v1414
      %v1416 = vadd.f32 %v1415, 1.0
      %v1417 = vrcp.pop %v1416
      %v1418 = vmul.f32 %v1416, %v1417
      %v1419 = vsub.f32 1.0, %v1418
      %v1420 = vmul.f32 %v1417, %v1419
      %v1421 = vadd.f32 %v1417, %v1420
      %vm1422 = vweird.f32 %v1416
      %vm1423 = vweird.f32 %v1417
      %vm1424 = vmor %vm1422, %vm1423
      %v1425 = vsel %vm1424, %v1417, %v1421
      %v1426 = vand.u32 2147483647, %v1416
      %vm1427 = vcmp.eq.f32.partialorder %v1426, 8.507059e+37
      %v1428 = vand.u32 %v1416, 2147483648
      %v1429 = vor.u32 1.1754944e-38, %v1428
      %v1430 = vsel %vm1427, %v1429, %v1425
      %v1431 = vmul.f32 1.0, %v1430
      %v1432 = vmul.f32 %v1412, %v1431
      %v1433 = vld [vmem:[%s11] sm:$0xff]
      %v1435 = vperm.slane %v1432, 0
      %v1437 = vmul.f32 %v1433, %v1435
      %vm1438 = vcmask 31744
      %v1439 = vsel %vm1438, %v1437, 0.0
      %1440 = vadd.xlane.f32.xlu0 %v1439
      %v1441 = vpop.xlane.xlu0 %1440
      %v1442 = vld [vmem:[%s12] sm:$0xff]
      %v1443 = vadd.f32 %v1441, %v1442
      %1445 = vset.pattern.permute.xlu0 0
      %1446 = vperm.xlu0 %1445, %v1443
      %v1447 = vpop.permute.xlu0 %1446
      %v1449 = vadd.f32 %v1409, %v1447
      %v1450 = vadd.f32 %v1410, %v1447
      %v1451 = vadd.f32 %v1411, %v1447
      %vm1452 = vcmask 125952
      %1453 = vst.msk [vmem:[%s471] sm:$0xf] %vm1452, %v1449
      %1455 = vrot.lane.b32.xlu0 %v1449, 126
      %v1456 = vpop.permute.xlu0 %1455
      %vm1458 = vcmask 257152
      %1459 = vst.msk [vmem:[%s471] sm:$0xf] %vm1458, %v1456
      %1460 = vrot.lane.b32.xlu0 %v1449, 124
      %v1461 = vpop.permute.xlu0 %1460
      %vm1463 = vcmask 388352
      %1464 = vst.msk [vmem:[%s471] sm:$0xf] %vm1463, %v1461
      %1465 = vrot.lane.b32.xlu0 %v1449, 122
      %v1466 = vpop.permute.xlu0 %1465
      %vm1468 = vcmask 519552
      %1469 = vst.msk [vmem:[%s471] sm:$0xf] %vm1468, %v1466
      %1470 = vrot.lane.b32.xlu0 %v1449, 120
      %v1471 = vpop.permute.xlu0 %1470
      %vm1473 = vcmask 650752
      %1474 = vst.msk [vmem:[%s471] sm:$0xf] %vm1473, %v1471
      %1475 = vrot.lane.b32.xlu0 %v1449, 118
      %v1476 = vpop.permute.xlu0 %1475
      %vm1478 = vcmask 781952
      %1479 = vst.msk [vmem:[%s471] sm:$0xf] %vm1478, %v1476
      %1480 = vrot.lane.b32.xlu0 %v1449, 116
      %v1481 = vpop.permute.xlu0 %1480
      %vm1483 = vcmask 913152
      %1484 = vst.msk [vmem:[%s471] sm:$0xf] %vm1483, %v1481
      %v1486 = vrot.slane %v1450, 4
      %v1487 = vsel %vm866, %v1449, %v1486
      %1488 = vrot.lane.b32.xlu0 %v1487, 114
      %v1489 = vpop.permute.xlu0 %1488
      %v1490 = vrot.slane %v1489, 4
      %vm1491 = vcmask 932864
      %v1492 = vsel %vm1491, %v1489, %v1490
      %vm1494 = vcmask 1044352
      %1495 = vst.msk [vmem:[%s471] sm:$0xf] %vm1494, %v1492
      %1496 = vrot.lane.b32.xlu0 %v1450, 112
      %v1497 = vpop.permute.xlu0 %1496
      %1499 = vst.msk [vmem:[%s471 + $0x4] sm:$0xf] %vm1452, %v1497
      %1500 = vrot.lane.b32.xlu0 %v1450, 110
      %v1501 = vpop.permute.xlu0 %1500
      %1503 = vst.msk [vmem:[%s471 + $0x4] sm:$0xf] %vm1458, %v1501
      %1504 = vrot.lane.b32.xlu0 %v1450, 108
      %v1505 = vpop.permute.xlu0 %1504
      %1507 = vst.msk [vmem:[%s471 + $0x4] sm:$0xf] %vm1463, %v1505
      %1508 = vrot.lane.b32.xlu0 %v1450, 106
      %v1509 = vpop.permute.xlu0 %1508
      %1511 = vst.msk [vmem:[%s471 + $0x4] sm:$0xf] %vm1468, %v1509
      %1512 = vrot.lane.b32.xlu0 %v1450, 104
      %v1513 = vpop.permute.xlu0 %1512
      %1515 = vst.msk [vmem:[%s471 + $0x4] sm:$0xf] %vm1473, %v1513
      %1516 = vrot.lane.b32.xlu0 %v1450, 102
      %v1517 = vpop.permute.xlu0 %1516
      %1519 = vst.msk [vmem:[%s471 + $0x4] sm:$0xf] %vm1478, %v1517
      %v1521 = vrot.slane %v1451, 4
      %v1522 = vsel %vm866, %v1450, %v1521
      %1523 = vrot.lane.b32.xlu0 %v1522, 100
      %v1524 = vpop.permute.xlu0 %1523
      %v1525 = vrot.slane %v1524, 4
      %vm1526 = vcmask 818176
      %v1527 = vsel %vm1526, %v1524, %v1525
      %1529 = vst.msk [vmem:[%s471 + $0x4] sm:$0xf] %vm1483, %v1527
      %1530 = vrot.lane.b32.xlu0 %v1451, 98
      %v1531 = vpop.permute.xlu0 %1530
      %1533 = vst.msk [vmem:[%s471 + $0x4] sm:$0xf] %vm1494, %v1531
      %p1534 = scmp.lt.s32.totalorder %s24, 1
      %s1535 = scalar_select %p1534, %s24, 1
      %s1536 = smul.addr %s1535, 2
      %s1537 = smul.addr %s1536, 4
      %s1538 = scalar_lea.vmem %s13, %s1537
      // Predicated region
      $region73: #{up_forward.1} parent=71 // pred_check
        %p1539 = pneg %p330
      $region74: #{up_forward.1} parent=71 // pred_check_branch
        %1541 = sbr.rel (%p1539) target = $region76
      $region75: #{up_forward.1} parent=71 // pred_region
        _
      $region76: #{up_forward.1} parent=71 // pred_fallthru
        _
    $region72: #{up_forward.1} parent=5 // pred_fallthru
      _
    %p1542 = scmp.le.s32.totalorder 2, %s19
    // Predicated region
    $region77: #{up_forward.1} parent=5 // pred_check
      %p1543 = pneg %p1542
    $region78: #{up_forward.1} parent=5 // pred_check_branch
      %1545 = sbr.rel (%p1543) target = $region80
    $region79: #{up_forward.1} parent=5 // pred_region
      %s1546 = ssub.s32 %s19, 2
      // Predicated region
      $region81: #{up_forward.1} parent=79 // pred_check
        %p1547 = pneg %p336
      $region82: #{up_forward.1} parent=79 // pred_check_branch
        %1549 = sbr.rel (%p1547) target = $region84
      $region83: #{up_forward.1} parent=79 // pred_region
        %p1550 = scmp.lt.s32.totalorder %s25, 1
        %s1551 = scalar_select %p1550, %s25, 1
        %s1552 = smul.addr %s1551, 2
        %s1553 = smul.addr %s1552, 4
        %s1554 = scalar_lea.vmem %s13, %s1553
      $region84: #{up_forward.1} parent=79 // pred_fallthru
        _
    $region80: #{up_forward.1} parent=5 // pred_fallthru
      _
  $region6: #{up_forward.1} parent=0 // loop_footer
    %s23 = sadd.s32 1, %s19
  $region7: #{up_forward.1} parent=0 // loop_footer_branch
    %18 = sbr.rel target = $region3
  $region8: #{up_forward.1} parent=0 // loop_exit
    _

</llo_original>
